<compile_context>
chip_gen: v7x
topology: tpu7x:2x2x1
jax: 0.10.0
libtpu: 0.0.40
codegen_flags: <defaults>
</compile_context>

<pallas_src>
import jax
import jax.numpy as jnp
from jax import lax
from jax.experimental import pallas as pl
from jax.experimental.pallas import tpu as pltpu


def kernel_mus(n_kernels):
    l_mu = [1.0]
    if n_kernels == 1:
        return l_mu
    bin_size = 2.0 / (n_kernels - 1)
    l_mu.append(1.0 - bin_size / 2)
    for i in range(1, n_kernels - 1):
        l_mu.append(l_mu[i] - bin_size)
    return l_mu


def kernel_sigmas(n_kernels):
    l_sigma = [0.001]
    if n_kernels == 1:
        return l_sigma
    l_sigma += [0.1] * (n_kernels - 1)
    return l_sigma


def _round_up(x, m):
    return ((x + m - 1) // m) * m


def make_knrm_kernel(K, mus, sigmas):
    mus = [float(m) for m in mus]
    sigmas = [float(s) for s in sigmas]

    def knrm_kernel(q_ref, d_ref, mq_ref, md_ref, w_ref, b_ref, out_ref):
        # q_ref : [Bt, Lq_p, E]   d_ref : [Bt, Ld_p, E]
        # mq_ref: [Bt, Lq_p, 1]   md_ref: [Bt, 1, Ld_p]
        # w_ref : [K] (SMEM, already scaled by 0.01)   b_ref: [1] (SMEM)
        # out_ref: [Bt, 1, 1]
        q = q_ref[...]
        d = d_ref[...]
        mq = mq_ref[...]
        md = md_ref[...]

        # F.normalize(p=2, dim=2) with default eps=1e-12.
        qn = q / jnp.maximum(jnp.sqrt(jnp.sum(q * q, axis=-1, keepdims=True)), 1e-12)
        dn = d / jnp.maximum(jnp.sqrt(jnp.sum(d * d, axis=-1, keepdims=True)), 1e-12)

        # Batched similarity matrix on the MXU: [Bt, Lq_p, Ld_p]
        sim = jnp.einsum('bqe,bde->bqd', qn, dn,
                         preferred_element_type=jnp.float32)

        bt = q.shape[0]
        acc = jnp.zeros((bt, 1, 1), jnp.float32) + b_ref[0]

        # RBF kernel pooling, unrolled over K (mu/sigma baked in as constants).
        for k in range(K):
            scale = -1.0 / (2.0 * sigmas[k] * sigmas[k])
            diff = sim - mus[k]
            pv = jnp.exp(diff * diff * scale) * md          # [Bt, Lq_p, Ld_p]
            ps = jnp.sum(pv, axis=-1, keepdims=True)        # [Bt, Lq_p, 1]
            # 0.01 already folded into w_ref.
            lps = jnp.log(jnp.maximum(ps, 1e-10)) * mq      # [Bt, Lq_p, 1]
            feat = jnp.sum(lps, axis=1, keepdims=True)      # [Bt, 1, 1]
            acc = acc + w_ref[k] * feat

        out_ref[...] = jnp.tanh(acc)

    return knrm_kernel


def knrm_forward(inputs_q, inputs_d, mask_q, mask_d, w, b, K, mus, sigmas,
                 vmem_block_budget_bytes=4 << 20, max_b_tile=512):
    B, Lq, E = inputs_q.shape
    Bd, Ld, Ed = inputs_d.shape
    assert Bd == B and Ed == E

    f32 = jnp.float32
    Lq_p = _round_up(Lq, 8)      # sublane alignment
    Ld_p = _round_up(Ld, 128)    # lane alignment

    # Per-batch-element VMEM footprint of one block (inputs + masks + sim-sized
    # intermediates), used to size the batch tile; conservative so that the
    # double-buffered block fits comfortably even on v7x's 64 MiB VMEM.
    per_elem = 4 * (Lq_p * E + Ld_p * E + 2 * Lq_p * Ld_p + Lq_p + Ld_p)
    bt = int(max(1, min(B, max_b_tile, vmem_block_budget_bytes // per_elem)))
    B_p = _round_up(B, bt)
    n_blocks = B_p // bt

    # Zero-pad: padded doc columns are killed by md=0, padded query rows by
    # mq=0, padded batch rows are sliced away at the end.
    q = jnp.zeros((B_p, Lq_p, E), f32).at[:B, :Lq, :].set(inputs_q.astype(f32))
    d = jnp.zeros((B_p, Ld_p, E), f32).at[:B, :Ld, :].set(inputs_d.astype(f32))
    mq = jnp.zeros((B_p, Lq_p, 1), f32).at[:B, :Lq, 0].set(mask_q.astype(f32))
    md = jnp.zeros((B_p, 1, Ld_p), f32).at[:B, 0, :Ld].set(mask_d.astype(f32))
    # TODO(synk): if callers can guarantee prefix masks, pass lengths as
    # scalar-prefetch and build masks in-kernel from broadcasted_iota instead.

    w_eff = w.astype(f32) * f32(0.01)   # fold the 0.01 log-scale into the dense weights
    b_f = b.astype(f32)

    kernel = make_knrm_kernel(K, mus, sigmas)

    out = pl.pallas_call(
        kernel,
        out_shape=jax.ShapeDtypeStruct((B_p, 1, 1), f32),
        grid=(n_blocks,),
        in_specs=[
            pl.BlockSpec((bt, Lq_p, E), lambda i: (i, 0, 0)),
            pl.BlockSpec((bt, Ld_p, E), lambda i: (i, 0, 0)),
            pl.BlockSpec((bt, Lq_p, 1), lambda i: (i, 0, 0)),
            pl.BlockSpec((bt, 1, Ld_p), lambda i: (i, 0, 0)),
            pl.BlockSpec(memory_space=pltpu.MemorySpace.SMEM),
            pl.BlockSpec(memory_space=pltpu.MemorySpace.SMEM),
        ],
        out_specs=pl.BlockSpec((bt, 1, 1), lambda i: (i, 0, 0)),
        compiler_params=pltpu.CompilerParams(
            dimension_semantics=("parallel",),          # lets v7x shard over 2 TCs
            vmem_limit_bytes=32 * 1024 * 1024,          # raise v5e's 16 MiB default
        ),
    )(q, d, mq, md, w_eff, b_f)

    return out.reshape(B_p, 1)[:B]


def knrm_reference(inputs_q, inputs_d, mask_q, mask_d, w, b, mus, sigmas):
    # Pure-JAX mirror of the PyTorch forward, for validation.
    qn = inputs_q / jnp.maximum(
        jnp.sqrt(jnp.sum(inputs_q * inputs_q, axis=2, keepdims=True)), 1e-12)
    dn = inputs_d / jnp.maximum(
        jnp.sqrt(jnp.sum(inputs_d * inputs_d, axis=2, keepdims=True)), 1e-12)
    sim = jnp.einsum('bqe,bde->bqd', qn, dn)[..., None]           # [B, Lq, Ld, 1]
    mu = jnp.asarray(mus, jnp.float32).reshape(1, 1, 1, -1)
    sigma = jnp.asarray(sigmas, jnp.float32).reshape(1, 1, 1, -1)
    md = mask_d.reshape(mask_d.shape[0], 1, mask_d.shape[1], 1)
    mq = mask_q.reshape(mask_q.shape[0], mask_q.shape[1], 1)
    pv = jnp.exp(-((sim - mu) ** 2) / (sigma ** 2) / 2.0) * md
    ps = jnp.sum(pv, axis=2)                                      # [B, Lq, K]
    lps = jnp.log(jnp.maximum(ps, 1e-10)) * 0.01 * mq
    feat = jnp.sum(lps, axis=1)                                   # [B, K]
    return jnp.tanh(feat @ w.reshape(-1, 1) + b)                  # [B, 1]


if __name__ == "__main__":
    K = 11
    B, Lq, Ld, E = 2, 8, 16, 32
    mus = kernel_mus(K)
    sigmas = kernel_sigmas(K)

    key = jax.random.PRNGKey(0)
    kq, kd, kw, kb = jax.random.split(key, 4)
    inputs_q = jax.random.normal(kq, (B, Lq, E), jnp.float32)
    inputs_d = jax.random.normal(kd, (B, Ld, E), jnp.float32)

    # deterministic 0/1 masks (first `len` positions valid per batch element)
    mask_q = (jnp.arange(Lq)[None, :] < jnp.array([[6], [8]])).astype(jnp.float32)
    mask_d = (jnp.arange(Ld)[None, :] < jnp.array([[12], [16]])).astype(jnp.float32)

    # nn.Linear(k, 1) parameters, deterministic init
    bound = 1.0 / (K ** 0.5)
    w = jax.random.uniform(kw, (K,), jnp.float32, -bound, bound)
    b = jax.random.uniform(kb, (1,), jnp.float32, -bound, bound)

    out = knrm_forward(inputs_q, inputs_d, mask_q, mask_d, w, b, K, mus, sigmas)
    out = jax.block_until_ready(out)

    ref = knrm_reference(inputs_q, inputs_d, mask_q, mask_d, w, b, mus, sigmas)
    assert out.shape == (B, 1)
    assert jnp.allclose(out, ref, rtol=1e-4, atol=1e-5), (out, ref)
    print("KERNEL_OK")
</pallas_src>

<mosaic_0001>
module attributes {stable_mosaic.version = 11 : i64} {
  func.func @knrm_kernel(%arg0: i32, %arg1: memref<2x8x32xf32, #tpu.memory_space<vmem>>, %arg2: memref<2x128x32xf32, #tpu.memory_space<vmem>>, %arg3: memref<2x8x1xf32, #tpu.memory_space<vmem>>, %arg4: memref<2x1x128xf32, #tpu.memory_space<vmem>>, %arg5: memref<11xf32, #tpu.memory_space<smem>>, %arg6: memref<1xf32, #tpu.memory_space<smem>>, %arg7: memref<2x1x1xf32, #tpu.memory_space<vmem>>) attributes {dimension_semantics = [#tpu.dimension_semantics<parallel>], iteration_bounds = array<i64: 1>, scalar_prefetch = 0 : i64, scratch_operands = 0 : i64, tpu.core_type = #tpu.core_type<tc>, window_params = [{transform_indices = @transform_0, window_bounds = array<i64: 2, 8, 32>}, {transform_indices = @transform_1, window_bounds = array<i64: 2, 128, 32>}, {transform_indices = @transform_2, window_bounds = array<i64: 2, 8, 1>}, {transform_indices = @transform_3, window_bounds = array<i64: 2, 1, 128>}, {transform_indices = @transform_4, window_bounds = array<i64: 11>}, {transform_indices = @transform_5, window_bounds = array<i64: 1>}, {transform_indices = @transform_6, window_bounds = array<i64: 2, 1, 1>}]} {
    %c0 = arith.constant 0 : index
    %c0_0 = arith.constant 0 : index
    %c0_1 = arith.constant 0 : index
    %0 = vector.load %arg1[%c0, %c0_0, %c0_1] : memref<2x8x32xf32, #tpu.memory_space<vmem>>, vector<2x8x32xf32>
    %c0_2 = arith.constant 0 : index
    %c0_3 = arith.constant 0 : index
    %c0_4 = arith.constant 0 : index
    %1 = vector.load %arg2[%c0_2, %c0_3, %c0_4] : memref<2x128x32xf32, #tpu.memory_space<vmem>>, vector<2x128x32xf32>
    %c0_5 = arith.constant 0 : index
    %c0_6 = arith.constant 0 : index
    %c0_7 = arith.constant 0 : index
    %2 = vector.load %arg3[%c0_5, %c0_6, %c0_7] : memref<2x8x1xf32, #tpu.memory_space<vmem>>, vector<2x8x1xf32>
    %c0_8 = arith.constant 0 : index
    %c0_9 = arith.constant 0 : index
    %c0_10 = arith.constant 0 : index
    %3 = vector.load %arg4[%c0_8, %c0_9, %c0_10] : memref<2x1x128xf32, #tpu.memory_space<vmem>>, vector<2x1x128xf32>
    %4 = arith.mulf %0, %0 : vector<2x8x32xf32>
    %cst = arith.constant dense<0.000000e+00> : vector<2x8xf32>
    %5 = vector.multi_reduction <add>, %4, %cst [2] : vector<2x8x32xf32> to vector<2x8xf32>
    %6 = vector.shape_cast %5 : vector<2x8xf32> to vector<2x8x1xf32>
    %7 = math.sqrt %6 : vector<2x8x1xf32>
    %cst_11 = arith.constant 9.99999996E-13 : f32
    %8 = vector.broadcast %cst_11 : f32 to vector<2x8x1xf32>
    %9 = arith.maximumf %7, %8 : vector<2x8x1xf32>
    %10 = vector.broadcast %9 : vector<2x8x1xf32> to vector<2x8x32xf32>
    %11 = arith.divf %0, %10 : vector<2x8x32xf32>
    %12 = arith.mulf %1, %1 : vector<2x128x32xf32>
    %cst_12 = arith.constant dense<0.000000e+00> : vector<2x128xf32>
    %13 = vector.multi_reduction <add>, %12, %cst_12 [2] : vector<2x128x32xf32> to vector<2x128xf32>
    %14 = vector.shape_cast %13 : vector<2x128xf32> to vector<2x128x1xf32>
    %15 = math.sqrt %14 : vector<2x128x1xf32>
    %cst_13 = arith.constant 9.99999996E-13 : f32
    %16 = vector.broadcast %cst_13 : f32 to vector<2x128x1xf32>
    %17 = arith.maximumf %15, %16 : vector<2x128x1xf32>
    %18 = vector.broadcast %17 : vector<2x128x1xf32> to vector<2x128x32xf32>
    %19 = arith.divf %1, %18 : vector<2x128x32xf32>
    "tpu.trace_start"() <{level = 10 : i32, message = "bqe,bde->bqd"}> : () -> ()
    %cst_14 = arith.constant dense<0.000000e+00> : vector<2x8x128xf32>
    %20 = tpu.matmul %11, %19, %cst_14 {dimension_numbers = #tpu.dot_dimension_numbers<[2], [2], [1], [1], [0, 0, 0, 1, 1, 1], [0], [0]>} : vector<2x8x32xf32>, vector<2x128x32xf32>, vector<2x8x128xf32> -> vector<2x8x128xf32>
    %cst_15 = arith.constant 0.000000e+00 : f32
    "tpu.trace_stop"() : () -> ()
    %21 = vector.broadcast %cst_15 : f32 to vector<2x1x1xf32>
    %c0_16 = arith.constant 0 : index
    %22 = memref.load %arg6[%c0_16] : memref<1xf32, #tpu.memory_space<smem>>
    %23 = vector.broadcast %22 : f32 to vector<2x1x1xf32>
    %24 = arith.addf %21, %23 : vector<2x1x1xf32>
    %cst_17 = arith.constant 1.000000e+00 : f32
    %25 = vector.broadcast %cst_17 : f32 to vector<2x8x128xf32>
    %26 = arith.subf %20, %25 : vector<2x8x128xf32>
    %27 = arith.mulf %26, %26 : vector<2x8x128xf32>
    %cst_18 = arith.constant -5.000000e+05 : f32
    %28 = vector.broadcast %cst_18 : f32 to vector<2x8x128xf32>
    %29 = arith.mulf %27, %28 : vector<2x8x128xf32>
    %30 = math.exp %29 : vector<2x8x128xf32>
    %31 = vector.broadcast %3 : vector<2x1x128xf32> to vector<2x8x128xf32>
    %32 = arith.mulf %30, %31 : vector<2x8x128xf32>
    %cst_19 = arith.constant dense<0.000000e+00> : vector<2x8xf32>
    %33 = vector.multi_reduction <add>, %32, %cst_19 [2] : vector<2x8x128xf32> to vector<2x8xf32>
    %34 = vector.shape_cast %33 : vector<2x8xf32> to vector<2x8x1xf32>
    %cst_20 = arith.constant 1.000000e-10 : f32
    %35 = vector.broadcast %cst_20 : f32 to vector<2x8x1xf32>
    %36 = arith.maximumf %34, %35 : vector<2x8x1xf32>
    %37 = math.log %36 : vector<2x8x1xf32>
    %38 = arith.mulf %37, %2 : vector<2x8x1xf32>
    %cst_21 = arith.constant dense<0.000000e+00> : vector<2x1xf32>
    %39 = vector.multi_reduction <add>, %38, %cst_21 [1] : vector<2x8x1xf32> to vector<2x1xf32>
    %40 = vector.shape_cast %39 : vector<2x1xf32> to vector<2x1x1xf32>
    %c0_22 = arith.constant 0 : index
    %41 = memref.load %arg5[%c0_22] : memref<11xf32, #tpu.memory_space<smem>>
    %42 = vector.broadcast %41 : f32 to vector<2x1x1xf32>
    %43 = arith.mulf %42, %40 : vector<2x1x1xf32>
    %44 = arith.addf %24, %43 : vector<2x1x1xf32>
    %cst_23 = arith.constant 0.899999976 : f32
    %45 = vector.broadcast %cst_23 : f32 to vector<2x8x128xf32>
    %46 = arith.subf %20, %45 : vector<2x8x128xf32>
    %47 = arith.mulf %46, %46 : vector<2x8x128xf32>
    %cst_24 = arith.constant -5.000000e+01 : f32
    %48 = vector.broadcast %cst_24 : f32 to vector<2x8x128xf32>
    %49 = arith.mulf %47, %48 : vector<2x8x128xf32>
    %50 = math.exp %49 : vector<2x8x128xf32>
    %51 = vector.broadcast %3 : vector<2x1x128xf32> to vector<2x8x128xf32>
    %52 = arith.mulf %50, %51 : vector<2x8x128xf32>
    %cst_25 = arith.constant dense<0.000000e+00> : vector<2x8xf32>
    %53 = vector.multi_reduction <add>, %52, %cst_25 [2] : vector<2x8x128xf32> to vector<2x8xf32>
    %54 = vector.shape_cast %53 : vector<2x8xf32> to vector<2x8x1xf32>
    %cst_26 = arith.constant 1.000000e-10 : f32
    %55 = vector.broadcast %cst_26 : f32 to vector<2x8x1xf32>
    %56 = arith.maximumf %54, %55 : vector<2x8x1xf32>
    %57 = math.log %56 : vector<2x8x1xf32>
    %58 = arith.mulf %57, %2 : vector<2x8x1xf32>
    %cst_27 = arith.constant dense<0.000000e+00> : vector<2x1xf32>
    %59 = vector.multi_reduction <add>, %58, %cst_27 [1] : vector<2x8x1xf32> to vector<2x1xf32>
    %60 = vector.shape_cast %59 : vector<2x1xf32> to vector<2x1x1xf32>
    %c1 = arith.constant 1 : index
    %61 = memref.load %arg5[%c1] : memref<11xf32, #tpu.memory_space<smem>>
    %62 = vector.broadcast %61 : f32 to vector<2x1x1xf32>
    %63 = arith.mulf %62, %60 : vector<2x1x1xf32>
    %64 = arith.addf %44, %63 : vector<2x1x1xf32>
    %cst_28 = arith.constant 0.699999988 : f32
    %65 = vector.broadcast %cst_28 : f32 to vector<2x8x128xf32>
    %66 = arith.subf %20, %65 : vector<2x8x128xf32>
    %67 = arith.mulf %66, %66 : vector<2x8x128xf32>
    %cst_29 = arith.constant -5.000000e+01 : f32
    %68 = vector.broadcast %cst_29 : f32 to vector<2x8x128xf32>
    %69 = arith.mulf %67, %68 : vector<2x8x128xf32>
    %70 = math.exp %69 : vector<2x8x128xf32>
    %71 = vector.broadcast %3 : vector<2x1x128xf32> to vector<2x8x128xf32>
    %72 = arith.mulf %70, %71 : vector<2x8x128xf32>
    %cst_30 = arith.constant dense<0.000000e+00> : vector<2x8xf32>
    %73 = vector.multi_reduction <add>, %72, %cst_30 [2] : vector<2x8x128xf32> to vector<2x8xf32>
    %74 = vector.shape_cast %73 : vector<2x8xf32> to vector<2x8x1xf32>
    %cst_31 = arith.constant 1.000000e-10 : f32
    %75 = vector.broadcast %cst_31 : f32 to vector<2x8x1xf32>
    %76 = arith.maximumf %74, %75 : vector<2x8x1xf32>
    %77 = math.log %76 : vector<2x8x1xf32>
    %78 = arith.mulf %77, %2 : vector<2x8x1xf32>
    %cst_32 = arith.constant dense<0.000000e+00> : vector<2x1xf32>
    %79 = vector.multi_reduction <add>, %78, %cst_32 [1] : vector<2x8x1xf32> to vector<2x1xf32>
    %80 = vector.shape_cast %79 : vector<2x1xf32> to vector<2x1x1xf32>
    %c2 = arith.constant 2 : index
    %81 = memref.load %arg5[%c2] : memref<11xf32, #tpu.memory_space<smem>>
    %82 = vector.broadcast %81 : f32 to vector<2x1x1xf32>
    %83 = arith.mulf %82, %80 : vector<2x1x1xf32>
    %84 = arith.addf %64, %83 : vector<2x1x1xf32>
    %cst_33 = arith.constant 5.000000e-01 : f32
    %85 = vector.broadcast %cst_33 : f32 to vector<2x8x128xf32>
    %86 = arith.subf %20, %85 : vector<2x8x128xf32>
    %87 = arith.mulf %86, %86 : vector<2x8x128xf32>
    %cst_34 = arith.constant -5.000000e+01 : f32
    %88 = vector.broadcast %cst_34 : f32 to vector<2x8x128xf32>
    %89 = arith.mulf %87, %88 : vector<2x8x128xf32>
    %90 = math.exp %89 : vector<2x8x128xf32>
    %91 = vector.broadcast %3 : vector<2x1x128xf32> to vector<2x8x128xf32>
    %92 = arith.mulf %90, %91 : vector<2x8x128xf32>
    %cst_35 = arith.constant dense<0.000000e+00> : vector<2x8xf32>
    %93 = vector.multi_reduction <add>, %92, %cst_35 [2] : vector<2x8x128xf32> to vector<2x8xf32>
    %94 = vector.shape_cast %93 : vector<2x8xf32> to vector<2x8x1xf32>
    %cst_36 = arith.constant 1.000000e-10 : f32
    %95 = vector.broadcast %cst_36 : f32 to vector<2x8x1xf32>
    %96 = arith.maximumf %94, %95 : vector<2x8x1xf32>
    %97 = math.log %96 : vector<2x8x1xf32>
    %98 = arith.mulf %97, %2 : vector<2x8x1xf32>
    %cst_37 = arith.constant dense<0.000000e+00> : vector<2x1xf32>
    %99 = vector.multi_reduction <add>, %98, %cst_37 [1] : vector<2x8x1xf32> to vector<2x1xf32>
    %100 = vector.shape_cast %99 : vector<2x1xf32> to vector<2x1x1xf32>
    %c3 = arith.constant 3 : index
    %101 = memref.load %arg5[%c3] : memref<11xf32, #tpu.memory_space<smem>>
    %102 = vector.broadcast %101 : f32 to vector<2x1x1xf32>
    %103 = arith.mulf %102, %100 : vector<2x1x1xf32>
    %104 = arith.addf %84, %103 : vector<2x1x1xf32>
    %cst_38 = arith.constant 3.000000e-01 : f32
    %105 = vector.broadcast %cst_38 : f32 to vector<2x8x128xf32>
    %106 = arith.subf %20, %105 : vector<2x8x128xf32>
    %107 = arith.mulf %106, %106 : vector<2x8x128xf32>
    %cst_39 = arith.constant -5.000000e+01 : f32
    %108 = vector.broadcast %cst_39 : f32 to vector<2x8x128xf32>
    %109 = arith.mulf %107, %108 : vector<2x8x128xf32>
    %110 = math.exp %109 : vector<2x8x128xf32>
    %111 = vector.broadcast %3 : vector<2x1x128xf32> to vector<2x8x128xf32>
    %112 = arith.mulf %110, %111 : vector<2x8x128xf32>
    %cst_40 = arith.constant dense<0.000000e+00> : vector<2x8xf32>
    %113 = vector.multi_reduction <add>, %112, %cst_40 [2] : vector<2x8x128xf32> to vector<2x8xf32>
    %114 = vector.shape_cast %113 : vector<2x8xf32> to vector<2x8x1xf32>
    %cst_41 = arith.constant 1.000000e-10 : f32
    %115 = vector.broadcast %cst_41 : f32 to vector<2x8x1xf32>
    %116 = arith.maximumf %114, %115 : vector<2x8x1xf32>
    %117 = math.log %116 : vector<2x8x1xf32>
    %118 = arith.mulf %117, %2 : vector<2x8x1xf32>
    %cst_42 = arith.constant dense<0.000000e+00> : vector<2x1xf32>
    %119 = vector.multi_reduction <add>, %118, %cst_42 [1] : vector<2x8x1xf32> to vector<2x1xf32>
    %120 = vector.shape_cast %119 : vector<2x1xf32> to vector<2x1x1xf32>
    %c4 = arith.constant 4 : index
    %121 = memref.load %arg5[%c4] : memref<11xf32, #tpu.memory_space<smem>>
    %122 = vector.broadcast %121 : f32 to vector<2x1x1xf32>
    %123 = arith.mulf %122, %120 : vector<2x1x1xf32>
    %124 = arith.addf %104, %123 : vector<2x1x1xf32>
    %cst_43 = arith.constant 1.000000e-01 : f32
    %125 = vector.broadcast %cst_43 : f32 to vector<2x8x128xf32>
    %126 = arith.subf %20, %125 : vector<2x8x128xf32>
    %127 = arith.mulf %126, %126 : vector<2x8x128xf32>
    %cst_44 = arith.constant -5.000000e+01 : f32
    %128 = vector.broadcast %cst_44 : f32 to vector<2x8x128xf32>
    %129 = arith.mulf %127, %128 : vector<2x8x128xf32>
    %130 = math.exp %129 : vector<2x8x128xf32>
    %131 = vector.broadcast %3 : vector<2x1x128xf32> to vector<2x8x128xf32>
    %132 = arith.mulf %130, %131 : vector<2x8x128xf32>
    %cst_45 = arith.constant dense<0.000000e+00> : vector<2x8xf32>
    %133 = vector.multi_reduction <add>, %132, %cst_45 [2] : vector<2x8x128xf32> to vector<2x8xf32>
    %134 = vector.shape_cast %133 : vector<2x8xf32> to vector<2x8x1xf32>
    %cst_46 = arith.constant 1.000000e-10 : f32
    %135 = vector.broadcast %cst_46 : f32 to vector<2x8x1xf32>
    %136 = arith.maximumf %134, %135 : vector<2x8x1xf32>
    %137 = math.log %136 : vector<2x8x1xf32>
    %138 = arith.mulf %137, %2 : vector<2x8x1xf32>
    %cst_47 = arith.constant dense<0.000000e+00> : vector<2x1xf32>
    %139 = vector.multi_reduction <add>, %138, %cst_47 [1] : vector<2x8x1xf32> to vector<2x1xf32>
    %140 = vector.shape_cast %139 : vector<2x1xf32> to vector<2x1x1xf32>
    %c5 = arith.constant 5 : index
    %141 = memref.load %arg5[%c5] : memref<11xf32, #tpu.memory_space<smem>>
    %142 = vector.broadcast %141 : f32 to vector<2x1x1xf32>
    %143 = arith.mulf %142, %140 : vector<2x1x1xf32>
    %144 = arith.addf %124, %143 : vector<2x1x1xf32>
    %cst_48 = arith.constant -1.000000e-01 : f32
    %145 = vector.broadcast %cst_48 : f32 to vector<2x8x128xf32>
    %146 = arith.subf %20, %145 : vector<2x8x128xf32>
    %147 = arith.mulf %146, %146 : vector<2x8x128xf32>
    %cst_49 = arith.constant -5.000000e+01 : f32
    %148 = vector.broadcast %cst_49 : f32 to vector<2x8x128xf32>
    %149 = arith.mulf %147, %148 : vector<2x8x128xf32>
    %150 = math.exp %149 : vector<2x8x128xf32>
    %151 = vector.broadcast %3 : vector<2x1x128xf32> to vector<2x8x128xf32>
    %152 = arith.mulf %150, %151 : vector<2x8x128xf32>
    %cst_50 = arith.constant dense<0.000000e+00> : vector<2x8xf32>
    %153 = vector.multi_reduction <add>, %152, %cst_50 [2] : vector<2x8x128xf32> to vector<2x8xf32>
    %154 = vector.shape_cast %153 : vector<2x8xf32> to vector<2x8x1xf32>
    %cst_51 = arith.constant 1.000000e-10 : f32
    %155 = vector.broadcast %cst_51 : f32 to vector<2x8x1xf32>
    %156 = arith.maximumf %154, %155 : vector<2x8x1xf32>
    %157 = math.log %156 : vector<2x8x1xf32>
    %158 = arith.mulf %157, %2 : vector<2x8x1xf32>
    %cst_52 = arith.constant dense<0.000000e+00> : vector<2x1xf32>
    %159 = vector.multi_reduction <add>, %158, %cst_52 [1] : vector<2x8x1xf32> to vector<2x1xf32>
    %160 = vector.shape_cast %159 : vector<2x1xf32> to vector<2x1x1xf32>
    %c6 = arith.constant 6 : index
    %161 = memref.load %arg5[%c6] : memref<11xf32, #tpu.memory_space<smem>>
    %162 = vector.broadcast %161 : f32 to vector<2x1x1xf32>
    %163 = arith.mulf %162, %160 : vector<2x1x1xf32>
    %164 = arith.addf %144, %163 : vector<2x1x1xf32>
    %cst_53 = arith.constant -3.000000e-01 : f32
    %165 = vector.broadcast %cst_53 : f32 to vector<2x8x128xf32>
    %166 = arith.subf %20, %165 : vector<2x8x128xf32>
    %167 = arith.mulf %166, %166 : vector<2x8x128xf32>
    %cst_54 = arith.constant -5.000000e+01 : f32
    %168 = vector.broadcast %cst_54 : f32 to vector<2x8x128xf32>
    %169 = arith.mulf %167, %168 : vector<2x8x128xf32>
    %170 = math.exp %169 : vector<2x8x128xf32>
    %171 = vector.broadcast %3 : vector<2x1x128xf32> to vector<2x8x128xf32>
    %172 = arith.mulf %170, %171 : vector<2x8x128xf32>
    %cst_55 = arith.constant dense<0.000000e+00> : vector<2x8xf32>
    %173 = vector.multi_reduction <add>, %172, %cst_55 [2] : vector<2x8x128xf32> to vector<2x8xf32>
    %174 = vector.shape_cast %173 : vector<2x8xf32> to vector<2x8x1xf32>
    %cst_56 = arith.constant 1.000000e-10 : f32
    %175 = vector.broadcast %cst_56 : f32 to vector<2x8x1xf32>
    %176 = arith.maximumf %174, %175 : vector<2x8x1xf32>
    %177 = math.log %176 : vector<2x8x1xf32>
    %178 = arith.mulf %177, %2 : vector<2x8x1xf32>
    %cst_57 = arith.constant dense<0.000000e+00> : vector<2x1xf32>
    %179 = vector.multi_reduction <add>, %178, %cst_57 [1] : vector<2x8x1xf32> to vector<2x1xf32>
    %180 = vector.shape_cast %179 : vector<2x1xf32> to vector<2x1x1xf32>
    %c7 = arith.constant 7 : index
    %181 = memref.load %arg5[%c7] : memref<11xf32, #tpu.memory_space<smem>>
    %182 = vector.broadcast %181 : f32 to vector<2x1x1xf32>
    %183 = arith.mulf %182, %180 : vector<2x1x1xf32>
    %184 = arith.addf %164, %183 : vector<2x1x1xf32>
    %cst_58 = arith.constant -5.000000e-01 : f32
    %185 = vector.broadcast %cst_58 : f32 to vector<2x8x128xf32>
    %186 = arith.subf %20, %185 : vector<2x8x128xf32>
    %187 = arith.mulf %186, %186 : vector<2x8x128xf32>
    %cst_59 = arith.constant -5.000000e+01 : f32
    %188 = vector.broadcast %cst_59 : f32 to vector<2x8x128xf32>
    %189 = arith.mulf %187, %188 : vector<2x8x128xf32>
    %190 = math.exp %189 : vector<2x8x128xf32>
    %191 = vector.broadcast %3 : vector<2x1x128xf32> to vector<2x8x128xf32>
    %192 = arith.mulf %190, %191 : vector<2x8x128xf32>
    %cst_60 = arith.constant dense<0.000000e+00> : vector<2x8xf32>
    %193 = vector.multi_reduction <add>, %192, %cst_60 [2] : vector<2x8x128xf32> to vector<2x8xf32>
    %194 = vector.shape_cast %193 : vector<2x8xf32> to vector<2x8x1xf32>
    %cst_61 = arith.constant 1.000000e-10 : f32
    %195 = vector.broadcast %cst_61 : f32 to vector<2x8x1xf32>
    %196 = arith.maximumf %194, %195 : vector<2x8x1xf32>
    %197 = math.log %196 : vector<2x8x1xf32>
    %198 = arith.mulf %197, %2 : vector<2x8x1xf32>
    %cst_62 = arith.constant dense<0.000000e+00> : vector<2x1xf32>
    %199 = vector.multi_reduction <add>, %198, %cst_62 [1] : vector<2x8x1xf32> to vector<2x1xf32>
    %200 = vector.shape_cast %199 : vector<2x1xf32> to vector<2x1x1xf32>
    %c8 = arith.constant 8 : index
    %201 = memref.load %arg5[%c8] : memref<11xf32, #tpu.memory_space<smem>>
    %202 = vector.broadcast %201 : f32 to vector<2x1x1xf32>
    %203 = arith.mulf %202, %200 : vector<2x1x1xf32>
    %204 = arith.addf %184, %203 : vector<2x1x1xf32>
    %cst_63 = arith.constant -0.699999988 : f32
    %205 = vector.broadcast %cst_63 : f32 to vector<2x8x128xf32>
    %206 = arith.subf %20, %205 : vector<2x8x128xf32>
    %207 = arith.mulf %206, %206 : vector<2x8x128xf32>
    %cst_64 = arith.constant -5.000000e+01 : f32
    %208 = vector.broadcast %cst_64 : f32 to vector<2x8x128xf32>
    %209 = arith.mulf %207, %208 : vector<2x8x128xf32>
    %210 = math.exp %209 : vector<2x8x128xf32>
    %211 = vector.broadcast %3 : vector<2x1x128xf32> to vector<2x8x128xf32>
    %212 = arith.mulf %210, %211 : vector<2x8x128xf32>
    %cst_65 = arith.constant dense<0.000000e+00> : vector<2x8xf32>
    %213 = vector.multi_reduction <add>, %212, %cst_65 [2] : vector<2x8x128xf32> to vector<2x8xf32>
    %214 = vector.shape_cast %213 : vector<2x8xf32> to vector<2x8x1xf32>
    %cst_66 = arith.constant 1.000000e-10 : f32
    %215 = vector.broadcast %cst_66 : f32 to vector<2x8x1xf32>
    %216 = arith.maximumf %214, %215 : vector<2x8x1xf32>
    %217 = math.log %216 : vector<2x8x1xf32>
    %218 = arith.mulf %217, %2 : vector<2x8x1xf32>
    %cst_67 = arith.constant dense<0.000000e+00> : vector<2x1xf32>
    %219 = vector.multi_reduction <add>, %218, %cst_67 [1] : vector<2x8x1xf32> to vector<2x1xf32>
    %220 = vector.shape_cast %219 : vector<2x1xf32> to vector<2x1x1xf32>
    %c9 = arith.constant 9 : index
    %221 = memref.load %arg5[%c9] : memref<11xf32, #tpu.memory_space<smem>>
    %222 = vector.broadcast %221 : f32 to vector<2x1x1xf32>
    %223 = arith.mulf %222, %220 : vector<2x1x1xf32>
    %224 = arith.addf %204, %223 : vector<2x1x1xf32>
    %cst_68 = arith.constant -0.899999976 : f32
    %225 = vector.broadcast %cst_68 : f32 to vector<2x8x128xf32>
    %226 = arith.subf %20, %225 : vector<2x8x128xf32>
    %227 = arith.mulf %226, %226 : vector<2x8x128xf32>
    %cst_69 = arith.constant -5.000000e+01 : f32
    %228 = vector.broadcast %cst_69 : f32 to vector<2x8x128xf32>
    %229 = arith.mulf %227, %228 : vector<2x8x128xf32>
    %230 = math.exp %229 : vector<2x8x128xf32>
    %231 = vector.broadcast %3 : vector<2x1x128xf32> to vector<2x8x128xf32>
    %232 = arith.mulf %230, %231 : vector<2x8x128xf32>
    %cst_70 = arith.constant dense<0.000000e+00> : vector<2x8xf32>
    %233 = vector.multi_reduction <add>, %232, %cst_70 [2] : vector<2x8x128xf32> to vector<2x8xf32>
    %234 = vector.shape_cast %233 : vector<2x8xf32> to vector<2x8x1xf32>
    %cst_71 = arith.constant 1.000000e-10 : f32
    %235 = vector.broadcast %cst_71 : f32 to vector<2x8x1xf32>
    %236 = arith.maximumf %234, %235 : vector<2x8x1xf32>
    %237 = math.log %236 : vector<2x8x1xf32>
    %238 = arith.mulf %237, %2 : vector<2x8x1xf32>
    %cst_72 = arith.constant dense<0.000000e+00> : vector<2x1xf32>
    %239 = vector.multi_reduction <add>, %238, %cst_72 [1] : vector<2x8x1xf32> to vector<2x1xf32>
    %240 = vector.shape_cast %239 : vector<2x1xf32> to vector<2x1x1xf32>
    %c10 = arith.constant 10 : index
    %241 = memref.load %arg5[%c10] : memref<11xf32, #tpu.memory_space<smem>>
    %242 = vector.broadcast %241 : f32 to vector<2x1x1xf32>
    %243 = arith.mulf %242, %240 : vector<2x1x1xf32>
    %244 = arith.addf %224, %243 : vector<2x1x1xf32>
    %245 = math.tanh %244 : vector<2x1x1xf32>
    %c0_73 = arith.constant 0 : index
    %c0_74 = arith.constant 0 : index
    %c0_75 = arith.constant 0 : index
    %246 = vector.load %arg7[%c0_73, %c0_74, %c0_75] : memref<2x1x1xf32, #tpu.memory_space<vmem>>, vector<2x1x1xf32>
    tpu.vector_store %arg7[%c0_73, %c0_74, %c0_75], %245 {strides = array<i32>} : memref<2x1x1xf32, #tpu.memory_space<vmem>>, vector<2x1x1xf32>,
    return
  }
  func.func @transform_0(%arg0: i32) -> (i32, i32, i32) {
    %c0_i32 = arith.constant 0 : i32
    %c0_i32_0 = arith.constant 0 : i32
    %c0_i32_1 = arith.constant 0 : i32
    return %arg0, %c0_i32, %c0_i32_0 : i32, i32, i32
  }
  func.func @transform_1(%arg0: i32) -> (i32, i32, i32) {
    %c0_i32 = arith.constant 0 : i32
    %c0_i32_0 = arith.constant 0 : i32
    %c0_i32_1 = arith.constant 0 : i32
    return %arg0, %c0_i32, %c0_i32_0 : i32, i32, i32
  }
  func.func @transform_2(%arg0: i32) -> (i32, i32, i32) {
    %c0_i32 = arith.constant 0 : i32
    %c0_i32_0 = arith.constant 0 : i32
    %c0_i32_1 = arith.constant 0 : i32
    return %arg0, %c0_i32, %c0_i32_0 : i32, i32, i32
  }
  func.func @transform_3(%arg0: i32) -> (i32, i32, i32) {
    %c0_i32 = arith.constant 0 : i32
    %c0_i32_0 = arith.constant 0 : i32
    %c0_i32_1 = arith.constant 0 : i32
    return %arg0, %c0_i32, %c0_i32_0 : i32, i32, i32
  }
  func.func @transform_4(%arg0: i32) -> i32 {
    %c0_i32 = arith.constant 0 : i32
    %c0_i32_0 = arith.constant 0 : i32
    return %c0_i32 : i32
  }
  func.func @transform_5(%arg0: i32) -> i32 {
    %c0_i32 = arith.constant 0 : i32
    %c0_i32_0 = arith.constant 0 : i32
    return %c0_i32 : i32
  }
  func.func @transform_6(%arg0: i32) -> (i32, i32, i32) {
    %c0_i32 = arith.constant 0 : i32
    %c0_i32_0 = arith.constant 0 : i32
    %c0_i32_1 = arith.constant 0 : i32
    return %arg0, %c0_i32, %c0_i32_0 : i32, i32, i32
  }
}

</mosaic_0001>

<llo_original>
// kernel: tpu_custom_call.1
$region0: #{tpu_custom_call.1}
  #allocation0 [shape = 'u32[]', space=smem, size = 0x4, offset = 0x4, fixed_abs, tag = 'smem constant byte address 0x4 - core index']
  #allocation1 [shape = 'u32[144,128]{1,0:T(1,128)}', space=vmem, size = 0x12000, scoped, tag = 'internal scratch']
  #allocation2 [shape = 'f32[1]{0:T(128)S(6)}', space=smem, size = 0x200, scoped, tag = 'scoped memory for tpu_custom_call.1']
  %s0 = inlined_call_operand.vmem [shape: f32[2,8,32], index: 0, kind: input, shape index: {}]
  %s1 = inlined_call_operand.vmem [shape: f32[2,128,32], index: 1, kind: input, shape index: {}]
  %s2 = inlined_call_operand.vmem [shape: f32[2,8,1], index: 2, kind: input, shape index: {}]
  %s3 = inlined_call_operand.vmem [shape: f32[2,1,128], index: 3, kind: input, shape index: {}]
  %s4 = inlined_call_operand.vmem [shape: f32[11], index: 4, kind: input, shape index: {}]
  %s5 = inlined_call_operand.<no memory space> [shape: f32[1], index: 5, kind: input, shape index: {}]
  %s6 = inlined_call_operand.vmem [shape: f32[2,1,1], index: 6, kind: output, shape index: {}]
  %s7 = sld [smem:[#allocation0]]
  $region38: #{tpu_custom_call.1} parent=0
    _
  %s9 = ssub.s32 1, %s7
  %s10 = scalar_select 0, %s9, %s7
  %11 = sst [smem:[#allocation2]] %s5
  $region1: #{tpu_custom_call.1} parent=0
    #allocation3 [shape = 'u8[512]{0}', space=smem, size = 0x200, scoped, tag = 'input window, operand 4, single buffered']
    #allocation4 [shape = 's32[1]{0}', space=sflag, size = 0x4, scoped, tag = 'scoped memory for tpu_custom_call.1']
    %12 = vsyncpa [#allocation4], 0
    // Predicated region
    $region2: #{tpu_custom_call.1} parent=1 // pred_check
      _
    $region3: #{tpu_custom_call.1} parent=1 // pred_check_branch
      %14 = sbr.rel (0) target = $region5
    $region4: #{tpu_custom_call.1} parent=1 // pred_region
      _
    $region5: #{tpu_custom_call.1} parent=1 // pred_fallthru
      _
    // Predicated region
    $region6: #{tpu_custom_call.1} parent=1 // pred_check
      _
    $region7: #{tpu_custom_call.1} parent=1 // pred_check_branch
      %16 = sbr.rel (0) target = $region9
    $region8: #{tpu_custom_call.1} parent=1 // pred_region
      _
    $region9: #{tpu_custom_call.1} parent=1 // pred_fallthru
      _
    // Predicated region
    $region10: #{tpu_custom_call.1} parent=1 // pred_check
      _
    $region11: #{tpu_custom_call.1} parent=1 // pred_check_branch
      %18 = sbr.rel (0) target = $region13
    $region12: #{tpu_custom_call.1} parent=1 // pred_region
      _
    $region13: #{tpu_custom_call.1} parent=1 // pred_fallthru
      _
    // Predicated region
    $region14: #{tpu_custom_call.1} parent=1 // pred_check
      _
    $region15: #{tpu_custom_call.1} parent=1 // pred_check_branch
      %20 = sbr.rel (0) target = $region17
    $region16: #{tpu_custom_call.1} parent=1 // pred_region
      _
    $region17: #{tpu_custom_call.1} parent=1 // pred_fallthru
      _
    // Predicated region
    $region18: #{tpu_custom_call.1} parent=1 // pred_check
      _
    $region19: #{tpu_custom_call.1} parent=1 // pred_check_branch
      %22 = sbr.rel (0) target = $region21
    $region20: #{tpu_custom_call.1} parent=1 // pred_region
      %s24 = ssub.s32 16, 16
      %25 = vsyncadd [#allocation4], %s24
      %s27 = sshll.u32 %s4, 4
      %s28 = int_to_ptr.vmem [resolvable:$true] %s27
      %30 = dma.vmem_to_smem %s28, 16, [#allocation3], [#allocation4]
    $region21: #{tpu_custom_call.1} parent=1 // pred_fallthru
      _
    // Predicated region
    $region22: #{tpu_custom_call.1} parent=1 // pred_check
      _
    $region23: #{tpu_custom_call.1} parent=1 // pred_check_branch
      %32 = sbr.rel (0) target = $region25
    $region24: #{tpu_custom_call.1} parent=1 // pred_region
      _
    $region25: #{tpu_custom_call.1} parent=1 // pred_fallthru
      _
    // Predicated region
    $region26: #{tpu_custom_call.1} parent=1 // pred_check
      _
    $region27: #{tpu_custom_call.1} parent=1 // pred_check_branch
      %34 = sbr.rel (0) target = $region29
    $region28: #{tpu_custom_call.1} parent=1 // pred_region
      %35 = dma.done [#allocation4], 16
    $region29: #{tpu_custom_call.1} parent=1 // pred_fallthru
      _
    %36 = sfence
    %v37 = vld [vmem:[%s0] sm:$0xff]
    %v38 = vld [vmem:[%s0 + $0x8] sm:$0xff]
    %v39 = vld [vmem:[%s1] sm:$0xff]
    %v40 = vld [vmem:[%s1 + $0x8] sm:$0xff]
    %v41 = vld [vmem:[%s1 + $0x10] sm:$0xff]
    %v42 = vld [vmem:[%s1 + $0x18] sm:$0xff]
    %v43 = vld [vmem:[%s1 + $0x20] sm:$0xff]
    %v44 = vld [vmem:[%s1 + $0x28] sm:$0xff]
    %v45 = vld [vmem:[%s1 + $0x30] sm:$0xff]
    %v46 = vld [vmem:[%s1 + $0x38] sm:$0xff]
    %v47 = vld [vmem:[%s1 + $0x40] sm:$0xff]
    %v48 = vld [vmem:[%s1 + $0x48] sm:$0xff]
    %v49 = vld [vmem:[%s1 + $0x50] sm:$0xff]
    %v50 = vld [vmem:[%s1 + $0x58] sm:$0xff]
    %v51 = vld [vmem:[%s1 + $0x60] sm:$0xff]
    %v52 = vld [vmem:[%s1 + $0x68] sm:$0xff]
    %v53 = vld [vmem:[%s1 + $0x70] sm:$0xff]
    %v54 = vld [vmem:[%s1 + $0x78] sm:$0xff]
    %v55 = vld [vmem:[%s1 + $0x80] sm:$0xff]
    %v56 = vld [vmem:[%s1 + $0x88] sm:$0xff]
    %v57 = vld [vmem:[%s1 + $0x90] sm:$0xff]
    %v58 = vld [vmem:[%s1 + $0x98] sm:$0xff]
    %v59 = vld [vmem:[%s1 + $0xa0] sm:$0xff]
    %v60 = vld [vmem:[%s1 + $0xa8] sm:$0xff]
    %v61 = vld [vmem:[%s1 + $0xb0] sm:$0xff]
    %v62 = vld [vmem:[%s1 + $0xb8] sm:$0xff]
    %v63 = vld [vmem:[%s1 + $0xc0] sm:$0xff]
    %v64 = vld [vmem:[%s1 + $0xc8] sm:$0xff]
    %v65 = vld [vmem:[%s1 + $0xd0] sm:$0xff]
    %v66 = vld [vmem:[%s1 + $0xd8] sm:$0xff]
    %v67 = vld [vmem:[%s1 + $0xe0] sm:$0xff]
    %v68 = vld [vmem:[%s1 + $0xe8] sm:$0xff]
    %v69 = vld [vmem:[%s1 + $0xf0] sm:$0xff]
    %v70 = vld [vmem:[%s1 + $0xf8] sm:$0xff]
    %v71 = vld [vmem:[%s2] sm:$0xff]
    %v72 = vld [vmem:[%s2 + $0x8] sm:$0xff]
    %v73 = vld [vmem:[%s3] sm:$0x1]
    %v74 = vld [vmem:[%s3 + $0x1] sm:$0x1]
    %v75 = vmul.f32 %v37, %v37
    %v76 = vmul.f32 %v38, %v38
    %vm77 = vcmask 261120
    %v78 = vsel %vm77, %v75, 0.0
    %79 = vadd.xlane.f32.xlu0 %v78
    %v80 = vpop.xlane.xlu0 %79
    %v81 = vsel %vm77, %v76, 0.0
    %82 = vadd.xlane.f32.xlu0 %v81
    %v83 = vpop.xlane.xlu0 %82
    %v84 = vrsqrt.pop %v80
    %v85 = vmul.f32 %v80, %v84
    %vm86 = vcmp.eq.f32.partialorder %v80, inf
    %v87 = vsel %vm86, %v80, %v85
    %vm88 = vcmp.eq.f32.partialorder %v80, 0.0
    %v89 = vand.u32 %v80, 2147483648
    %v90 = vsel %vm88, %v89, %v87
    %v91 = vrsqrt.pop %v83
    %v92 = vmul.f32 %v83, %v91
    %vm93 = vcmp.eq.f32.partialorder %v83, inf
    %v94 = vsel %vm93, %v83, %v92
    %vm95 = vcmp.eq.f32.partialorder %v83, 0.0
    %v96 = vand.u32 %v83, 2147483648
    %v97 = vsel %vm95, %v96, %v94
    %v98 = vmax.f32 %v90, 1e-12
    %v99 = vmax.f32 %v97, 1e-12
    %v100 = vrcp.pop %v98
    %v101 = vmul.f32 %v37, %v100
    %v102 = vrcp.pop %v99
    %v103 = vmul.f32 %v38, %v102
    %v104 = vmul.f32 %v39, %v39
    %v105 = vmul.f32 %v40, %v40
    %v106 = vmul.f32 %v41, %v41
    %v107 = vmul.f32 %v42, %v42
    %v108 = vmul.f32 %v43, %v43
    %v109 = vmul.f32 %v44, %v44
    %v110 = vmul.f32 %v45, %v45
    %v111 = vmul.f32 %v46, %v46
    %v112 = vmul.f32 %v47, %v47
    %v113 = vmul.f32 %v48, %v48
    %v114 = vmul.f32 %v49, %v49
    %v115 = vmul.f32 %v50, %v50
    %v116 = vmul.f32 %v51, %v51
    %v117 = vmul.f32 %v52, %v52
    %v118 = vmul.f32 %v53, %v53
    %v119 = vmul.f32 %v54, %v54
    %v120 = vmul.f32 %v55, %v55
    %v121 = vmul.f32 %v56, %v56
    %v122 = vmul.f32 %v57, %v57
    %v123 = vmul.f32 %v58, %v58
    %v124 = vmul.f32 %v59, %v59
    %v125 = vmul.f32 %v60, %v60
    %v126 = vmul.f32 %v61, %v61
    %v127 = vmul.f32 %v62, %v62
    %v128 = vmul.f32 %v63, %v63
    %v129 = vmul.f32 %v64, %v64
    %v130 = vmul.f32 %v65, %v65
    %v131 = vmul.f32 %v66, %v66
    %v132 = vmul.f32 %v67, %v67
    %v133 = vmul.f32 %v68, %v68
    %v134 = vmul.f32 %v69, %v69
    %v135 = vmul.f32 %v70, %v70
    %v136 = vsel %vm77, %v104, 0.0
    %137 = vadd.xlane.f32.xlu0 %v136
    %v138 = vpop.xlane.xlu0 %137
    %v139 = vsel %vm77, %v105, 0.0
    %140 = vadd.xlane.f32.xlu0 %v139
    %v141 = vpop.xlane.xlu0 %140
    %v142 = vsel %vm77, %v106, 0.0
    %143 = vadd.xlane.f32.xlu0 %v142
    %v144 = vpop.xlane.xlu0 %143
    %v145 = vsel %vm77, %v107, 0.0
    %146 = vadd.xlane.f32.xlu0 %v145
    %v147 = vpop.xlane.xlu0 %146
    %v148 = vsel %vm77, %v108, 0.0
    %149 = vadd.xlane.f32.xlu0 %v148
    %v150 = vpop.xlane.xlu0 %149
    %v151 = vsel %vm77, %v109, 0.0
    %152 = vadd.xlane.f32.xlu0 %v151
    %v153 = vpop.xlane.xlu0 %152
    %v154 = vsel %vm77, %v110, 0.0
    %155 = vadd.xlane.f32.xlu0 %v154
    %v156 = vpop.xlane.xlu0 %155
    %v157 = vsel %vm77, %v111, 0.0
    %158 = vadd.xlane.f32.xlu0 %v157
    %v159 = vpop.xlane.xlu0 %158
    %v160 = vsel %vm77, %v112, 0.0
    %161 = vadd.xlane.f32.xlu0 %v160
    %v162 = vpop.xlane.xlu0 %161
    %v163 = vsel %vm77, %v113, 0.0
    %164 = vadd.xlane.f32.xlu0 %v163
    %v165 = vpop.xlane.xlu0 %164
    %v166 = vsel %vm77, %v114, 0.0
    %167 = vadd.xlane.f32.xlu0 %v166
    %v168 = vpop.xlane.xlu0 %167
    %v169 = vsel %vm77, %v115, 0.0
    %170 = vadd.xlane.f32.xlu0 %v169
    %v171 = vpop.xlane.xlu0 %170
    %v172 = vsel %vm77, %v116, 0.0
    %173 = vadd.xlane.f32.xlu0 %v172
    %v174 = vpop.xlane.xlu0 %173
    %v175 = vsel %vm77, %v117, 0.0
    %176 = vadd.xlane.f32.xlu0 %v175
    %v177 = vpop.xlane.xlu0 %176
    %v178 = vsel %vm77, %v118, 0.0
    %179 = vadd.xlane.f32.xlu0 %v178
    %v180 = vpop.xlane.xlu0 %179
    %v181 = vsel %vm77, %v119, 0.0
    %182 = vadd.xlane.f32.xlu0 %v181
    %v183 = vpop.xlane.xlu0 %182
    %v184 = vsel %vm77, %v120, 0.0
    %185 = vadd.xlane.f32.xlu0 %v184
    %v186 = vpop.xlane.xlu0 %185
    %v187 = vsel %vm77, %v121, 0.0
    %188 = vadd.xlane.f32.xlu0 %v187
    %v189 = vpop.xlane.xlu0 %188
    %v190 = vsel %vm77, %v122, 0.0
    %191 = vadd.xlane.f32.xlu0 %v190
    %v192 = vpop.xlane.xlu0 %191
    %v193 = vsel %vm77, %v123, 0.0
    %194 = vadd.xlane.f32.xlu0 %v193
    %v195 = vpop.xlane.xlu0 %194
    %v196 = vsel %vm77, %v124, 0.0
    %197 = vadd.xlane.f32.xlu0 %v196
    %v198 = vpop.xlane.xlu0 %197
    %v199 = vsel %vm77, %v125, 0.0
    %200 = vadd.xlane.f32.xlu0 %v199
    %v201 = vpop.xlane.xlu0 %200
    %v202 = vsel %vm77, %v126, 0.0
    %203 = vadd.xlane.f32.xlu0 %v202
    %v204 = vpop.xlane.xlu0 %203
    %v205 = vsel %vm77, %v127, 0.0
    %206 = vadd.xlane.f32.xlu0 %v205
    %v207 = vpop.xlane.xlu0 %206
    %v208 = vsel %vm77, %v128, 0.0
    %209 = vadd.xlane.f32.xlu0 %v208
    %v210 = vpop.xlane.xlu0 %209
    %v211 = vsel %vm77, %v129, 0.0
    %212 = vadd.xlane.f32.xlu0 %v211
    %v213 = vpop.xlane.xlu0 %212
    %v214 = vsel %vm77, %v130, 0.0
    %215 = vadd.xlane.f32.xlu0 %v214
    %v216 = vpop.xlane.xlu0 %215
    %v217 = vsel %vm77, %v131, 0.0
    %218 = vadd.xlane.f32.xlu0 %v217
    %v219 = vpop.xlane.xlu0 %218
    %v220 = vsel %vm77, %v132, 0.0
    %221 = vadd.xlane.f32.xlu0 %v220
    %v222 = vpop.xlane.xlu0 %221
    %v223 = vsel %vm77, %v133, 0.0
    %224 = vadd.xlane.f32.xlu0 %v223
    %v225 = vpop.xlane.xlu0 %224
    %v226 = vsel %vm77, %v134, 0.0
    %227 = vadd.xlane.f32.xlu0 %v226
    %v228 = vpop.xlane.xlu0 %227
    %v229 = vsel %vm77, %v135, 0.0
    %230 = vadd.xlane.f32.xlu0 %v229
    %v231 = vpop.xlane.xlu0 %230
    %v232 = vrsqrt.pop %v138
    %v233 = vmul.f32 %v138, %v232
    %vm234 = vcmp.eq.f32.partialorder %v138, inf
    %v235 = vsel %vm234, %v138, %v233
    %vm236 = vcmp.eq.f32.partialorder %v138, 0.0
    %v237 = vand.u32 %v138, 2147483648
    %v238 = vsel %vm236, %v237, %v235
    %v239 = vrsqrt.pop %v141
    %v240 = vmul.f32 %v141, %v239
    %vm241 = vcmp.eq.f32.partialorder %v141, inf
    %v242 = vsel %vm241, %v141, %v240
    %vm243 = vcmp.eq.f32.partialorder %v141, 0.0
    %v244 = vand.u32 %v141, 2147483648
    %v245 = vsel %vm243, %v244, %v242
    %v246 = vrsqrt.pop %v144
    %v247 = vmul.f32 %v144, %v246
    %vm248 = vcmp.eq.f32.partialorder %v144, inf
    %v249 = vsel %vm248, %v144, %v247
    %vm250 = vcmp.eq.f32.partialorder %v144, 0.0
    %v251 = vand.u32 %v144, 2147483648
    %v252 = vsel %vm250, %v251, %v249
    %v253 = vrsqrt.pop %v147
    %v254 = vmul.f32 %v147, %v253
    %vm255 = vcmp.eq.f32.partialorder %v147, inf
    %v256 = vsel %vm255, %v147, %v254
    %vm257 = vcmp.eq.f32.partialorder %v147, 0.0
    %v258 = vand.u32 %v147, 2147483648
    %v259 = vsel %vm257, %v258, %v256
    %v260 = vrsqrt.pop %v150
    %v261 = vmul.f32 %v150, %v260
    %vm262 = vcmp.eq.f32.partialorder %v150, inf
    %v263 = vsel %vm262, %v150, %v261
    %vm264 = vcmp.eq.f32.partialorder %v150, 0.0
    %v265 = vand.u32 %v150, 2147483648
    %v266 = vsel %vm264, %v265, %v263
    %v267 = vrsqrt.pop %v153
    %v268 = vmul.f32 %v153, %v267
    %vm269 = vcmp.eq.f32.partialorder %v153, inf
    %v270 = vsel %vm269, %v153, %v268
    %vm271 = vcmp.eq.f32.partialorder %v153, 0.0
    %v272 = vand.u32 %v153, 2147483648
    %v273 = vsel %vm271, %v272, %v270
    %v274 = vrsqrt.pop %v156
    %v275 = vmul.f32 %v156, %v274
    %vm276 = vcmp.eq.f32.partialorder %v156, inf
    %v277 = vsel %vm276, %v156, %v275
    %vm278 = vcmp.eq.f32.partialorder %v156, 0.0
    %v279 = vand.u32 %v156, 2147483648
    %v280 = vsel %vm278, %v279, %v277
    %v281 = vrsqrt.pop %v159
    %v282 = vmul.f32 %v159, %v281
    %vm283 = vcmp.eq.f32.partialorder %v159, inf
    %v284 = vsel %vm283, %v159, %v282
    %vm285 = vcmp.eq.f32.partialorder %v159, 0.0
    %v286 = vand.u32 %v159, 2147483648
    %v287 = vsel %vm285, %v286, %v284
    %v288 = vrsqrt.pop %v162
    %v289 = vmul.f32 %v162, %v288
    %vm290 = vcmp.eq.f32.partialorder %v162, inf
    %v291 = vsel %vm290, %v162, %v289
    %vm292 = vcmp.eq.f32.partialorder %v162, 0.0
    %v293 = vand.u32 %v162, 2147483648
    %v294 = vsel %vm292, %v293, %v291
    %v295 = vrsqrt.pop %v165
    %v296 = vmul.f32 %v165, %v295
    %vm297 = vcmp.eq.f32.partialorder %v165, inf
    %v298 = vsel %vm297, %v165, %v296
    %vm299 = vcmp.eq.f32.partialorder %v165, 0.0
    %v300 = vand.u32 %v165, 2147483648
    %v301 = vsel %vm299, %v300, %v298
    %v302 = vrsqrt.pop %v168
    %v303 = vmul.f32 %v168, %v302
    %vm304 = vcmp.eq.f32.partialorder %v168, inf
    %v305 = vsel %vm304, %v168, %v303
    %vm306 = vcmp.eq.f32.partialorder %v168, 0.0
    %v307 = vand.u32 %v168, 2147483648
    %v308 = vsel %vm306, %v307, %v305
    %v309 = vrsqrt.pop %v171
    %v310 = vmul.f32 %v171, %v309
    %vm311 = vcmp.eq.f32.partialorder %v171, inf
    %v312 = vsel %vm311, %v171, %v310
    %vm313 = vcmp.eq.f32.partialorder %v171, 0.0
    %v314 = vand.u32 %v171, 2147483648
    %v315 = vsel %vm313, %v314, %v312
    %v316 = vrsqrt.pop %v174
    %v317 = vmul.f32 %v174, %v316
    %vm318 = vcmp.eq.f32.partialorder %v174, inf
    %v319 = vsel %vm318, %v174, %v317
    %vm320 = vcmp.eq.f32.partialorder %v174, 0.0
    %v321 = vand.u32 %v174, 2147483648
    %v322 = vsel %vm320, %v321, %v319
    %v323 = vrsqrt.pop %v177
    %v324 = vmul.f32 %v177, %v323
    %vm325 = vcmp.eq.f32.partialorder %v177, inf
    %v326 = vsel %vm325, %v177, %v324
    %vm327 = vcmp.eq.f32.partialorder %v177, 0.0
    %v328 = vand.u32 %v177, 2147483648
    %v329 = vsel %vm327, %v328, %v326
    %v330 = vrsqrt.pop %v180
    %v331 = vmul.f32 %v180, %v330
    %vm332 = vcmp.eq.f32.partialorder %v180, inf
    %v333 = vsel %vm332, %v180, %v331
    %vm334 = vcmp.eq.f32.partialorder %v180, 0.0
    %v335 = vand.u32 %v180, 2147483648
    %v336 = vsel %vm334, %v335, %v333
    %v337 = vrsqrt.pop %v183
    %v338 = vmul.f32 %v183, %v337
    %vm339 = vcmp.eq.f32.partialorder %v183, inf
    %v340 = vsel %vm339, %v183, %v338
    %vm341 = vcmp.eq.f32.partialorder %v183, 0.0
    %v342 = vand.u32 %v183, 2147483648
    %v343 = vsel %vm341, %v342, %v340
    %v344 = vrsqrt.pop %v186
    %v345 = vmul.f32 %v186, %v344
    %vm346 = vcmp.eq.f32.partialorder %v186, inf
    %v347 = vsel %vm346, %v186, %v345
    %vm348 = vcmp.eq.f32.partialorder %v186, 0.0
    %v349 = vand.u32 %v186, 2147483648
    %v350 = vsel %vm348, %v349, %v347
    %v351 = vrsqrt.pop %v189
    %v352 = vmul.f32 %v189, %v351
    %vm353 = vcmp.eq.f32.partialorder %v189, inf
    %v354 = vsel %vm353, %v189, %v352
    %vm355 = vcmp.eq.f32.partialorder %v189, 0.0
    %v356 = vand.u32 %v189, 2147483648
    %v357 = vsel %vm355, %v356, %v354
    %v358 = vrsqrt.pop %v192
    %v359 = vmul.f32 %v192, %v358
    %vm360 = vcmp.eq.f32.partialorder %v192, inf
    %v361 = vsel %vm360, %v192, %v359
    %vm362 = vcmp.eq.f32.partialorder %v192, 0.0
    %v363 = vand.u32 %v192, 2147483648
    %v364 = vsel %vm362, %v363, %v361
    %v365 = vrsqrt.pop %v195
    %v366 = vmul.f32 %v195, %v365
    %vm367 = vcmp.eq.f32.partialorder %v195, inf
    %v368 = vsel %vm367, %v195, %v366
    %vm369 = vcmp.eq.f32.partialorder %v195, 0.0
    %v370 = vand.u32 %v195, 2147483648
    %v371 = vsel %vm369, %v370, %v368
    %v372 = vrsqrt.pop %v198
    %v373 = vmul.f32 %v198, %v372
    %vm374 = vcmp.eq.f32.partialorder %v198, inf
    %v375 = vsel %vm374, %v198, %v373
    %vm376 = vcmp.eq.f32.partialorder %v198, 0.0
    %v377 = vand.u32 %v198, 2147483648
    %v378 = vsel %vm376, %v377, %v375
    %v379 = vrsqrt.pop %v201
    %v380 = vmul.f32 %v201, %v379
    %vm381 = vcmp.eq.f32.partialorder %v201, inf
    %v382 = vsel %vm381, %v201, %v380
    %vm383 = vcmp.eq.f32.partialorder %v201, 0.0
    %v384 = vand.u32 %v201, 2147483648
    %v385 = vsel %vm383, %v384, %v382
    %v386 = vrsqrt.pop %v204
    %v387 = vmul.f32 %v204, %v386
    %vm388 = vcmp.eq.f32.partialorder %v204, inf
    %v389 = vsel %vm388, %v204, %v387
    %vm390 = vcmp.eq.f32.partialorder %v204, 0.0
    %v391 = vand.u32 %v204, 2147483648
    %v392 = vsel %vm390, %v391, %v389
    %v393 = vrsqrt.pop %v207
    %v394 = vmul.f32 %v207, %v393
    %vm395 = vcmp.eq.f32.partialorder %v207, inf
    %v396 = vsel %vm395, %v207, %v394
    %vm397 = vcmp.eq.f32.partialorder %v207, 0.0
    %v398 = vand.u32 %v207, 2147483648
    %v399 = vsel %vm397, %v398, %v396
    %v400 = vrsqrt.pop %v210
    %v401 = vmul.f32 %v210, %v400
    %vm402 = vcmp.eq.f32.partialorder %v210, inf
    %v403 = vsel %vm402, %v210, %v401
    %vm404 = vcmp.eq.f32.partialorder %v210, 0.0
    %v405 = vand.u32 %v210, 2147483648
    %v406 = vsel %vm404, %v405, %v403
    %v407 = vrsqrt.pop %v213
    %v408 = vmul.f32 %v213, %v407
    %vm409 = vcmp.eq.f32.partialorder %v213, inf
    %v410 = vsel %vm409, %v213, %v408
    %vm411 = vcmp.eq.f32.partialorder %v213, 0.0
    %v412 = vand.u32 %v213, 2147483648
    %v413 = vsel %vm411, %v412, %v410
    %v414 = vrsqrt.pop %v216
    %v415 = vmul.f32 %v216, %v414
    %vm416 = vcmp.eq.f32.partialorder %v216, inf
    %v417 = vsel %vm416, %v216, %v415
    %vm418 = vcmp.eq.f32.partialorder %v216, 0.0
    %v419 = vand.u32 %v216, 2147483648
    %v420 = vsel %vm418, %v419, %v417
    %v421 = vrsqrt.pop %v219
    %v422 = vmul.f32 %v219, %v421
    %vm423 = vcmp.eq.f32.partialorder %v219, inf
    %v424 = vsel %vm423, %v219, %v422
    %vm425 = vcmp.eq.f32.partialorder %v219, 0.0
    %v426 = vand.u32 %v219, 2147483648
    %v427 = vsel %vm425, %v426, %v424
    %v428 = vrsqrt.pop %v222
    %v429 = vmul.f32 %v222, %v428
    %vm430 = vcmp.eq.f32.partialorder %v222, inf
    %v431 = vsel %vm430, %v222, %v429
    %vm432 = vcmp.eq.f32.partialorder %v222, 0.0
    %v433 = vand.u32 %v222, 2147483648
    %v434 = vsel %vm432, %v433, %v431
    %v435 = vrsqrt.pop %v225
    %v436 = vmul.f32 %v225, %v435
    %vm437 = vcmp.eq.f32.partialorder %v225, inf
    %v438 = vsel %vm437, %v225, %v436
    %vm439 = vcmp.eq.f32.partialorder %v225, 0.0
    %v440 = vand.u32 %v225, 2147483648
    %v441 = vsel %vm439, %v440, %v438
    %v442 = vrsqrt.pop %v228
    %v443 = vmul.f32 %v228, %v442
    %vm444 = vcmp.eq.f32.partialorder %v228, inf
    %v445 = vsel %vm444, %v228, %v443
    %vm446 = vcmp.eq.f32.partialorder %v228, 0.0
    %v447 = vand.u32 %v228, 2147483648
    %v448 = vsel %vm446, %v447, %v445
    %v449 = vrsqrt.pop %v231
    %v450 = vmul.f32 %v231, %v449
    %vm451 = vcmp.eq.f32.partialorder %v231, inf
    %v452 = vsel %vm451, %v231, %v450
    %vm453 = vcmp.eq.f32.partialorder %v231, 0.0
    %v454 = vand.u32 %v231, 2147483648
    %v455 = vsel %vm453, %v454, %v452
    %v456 = vmax.f32 %v238, 1e-12
    %v457 = vmax.f32 %v245, 1e-12
    %v458 = vmax.f32 %v252, 1e-12
    %v459 = vmax.f32 %v259, 1e-12
    %v460 = vmax.f32 %v266, 1e-12
    %v461 = vmax.f32 %v273, 1e-12
    %v462 = vmax.f32 %v280, 1e-12
    %v463 = vmax.f32 %v287, 1e-12
    %v464 = vmax.f32 %v294, 1e-12
    %v465 = vmax.f32 %v301, 1e-12
    %v466 = vmax.f32 %v308, 1e-12
    %v467 = vmax.f32 %v315, 1e-12
    %v468 = vmax.f32 %v322, 1e-12
    %v469 = vmax.f32 %v329, 1e-12
    %v470 = vmax.f32 %v336, 1e-12
    %v471 = vmax.f32 %v343, 1e-12
    %v472 = vmax.f32 %v350, 1e-12
    %v473 = vmax.f32 %v357, 1e-12
    %v474 = vmax.f32 %v364, 1e-12
    %v475 = vmax.f32 %v371, 1e-12
    %v476 = vmax.f32 %v378, 1e-12
    %v477 = vmax.f32 %v385, 1e-12
    %v478 = vmax.f32 %v392, 1e-12
    %v479 = vmax.f32 %v399, 1e-12
    %v480 = vmax.f32 %v406, 1e-12
    %v481 = vmax.f32 %v413, 1e-12
    %v482 = vmax.f32 %v420, 1e-12
    %v483 = vmax.f32 %v427, 1e-12
    %v484 = vmax.f32 %v434, 1e-12
    %v485 = vmax.f32 %v441, 1e-12
    %v486 = vmax.f32 %v448, 1e-12
    %v487 = vmax.f32 %v455, 1e-12
    %v488 = vrcp.pop %v456
    %v489 = vmul.f32 %v39, %v488
    %v490 = vrcp.pop %v457
    %v491 = vmul.f32 %v40, %v490
    %v492 = vrcp.pop %v458
    %v493 = vmul.f32 %v41, %v492
    %v494 = vrcp.pop %v459
    %v495 = vmul.f32 %v42, %v494
    %v496 = vrcp.pop %v460
    %v497 = vmul.f32 %v43, %v496
    %v498 = vrcp.pop %v461
    %v499 = vmul.f32 %v44, %v498
    %v500 = vrcp.pop %v462
    %v501 = vmul.f32 %v45, %v500
    %v502 = vrcp.pop %v463
    %v503 = vmul.f32 %v46, %v502
    %v504 = vrcp.pop %v464
    %v505 = vmul.f32 %v47, %v504
    %v506 = vrcp.pop %v465
    %v507 = vmul.f32 %v48, %v506
    %v508 = vrcp.pop %v466
    %v509 = vmul.f32 %v49, %v508
    %v510 = vrcp.pop %v467
    %v511 = vmul.f32 %v50, %v510
    %v512 = vrcp.pop %v468
    %v513 = vmul.f32 %v51, %v512
    %v514 = vrcp.pop %v469
    %v515 = vmul.f32 %v52, %v514
    %v516 = vrcp.pop %v470
    %v517 = vmul.f32 %v53, %v516
    %v518 = vrcp.pop %v471
    %v519 = vmul.f32 %v54, %v518
    %v520 = vrcp.pop %v472
    %v521 = vmul.f32 %v55, %v520
    %v522 = vrcp.pop %v473
    %v523 = vmul.f32 %v56, %v522
    %v524 = vrcp.pop %v474
    %v525 = vmul.f32 %v57, %v524
    %v526 = vrcp.pop %v475
    %v527 = vmul.f32 %v58, %v526
    %v528 = vrcp.pop %v476
    %v529 = vmul.f32 %v59, %v528
    %v530 = vrcp.pop %v477
    %v531 = vmul.f32 %v60, %v530
    %v532 = vrcp.pop %v478
    %v533 = vmul.f32 %v61, %v532
    %v534 = vrcp.pop %v479
    %v535 = vmul.f32 %v62, %v534
    %v536 = vrcp.pop %v480
    %v537 = vmul.f32 %v63, %v536
    %v538 = vrcp.pop %v481
    %v539 = vmul.f32 %v64, %v538
    %v540 = vrcp.pop %v482
    %v541 = vmul.f32 %v65, %v540
    %v542 = vrcp.pop %v483
    %v543 = vmul.f32 %v66, %v542
    %v544 = vrcp.pop %v484
    %v545 = vmul.f32 %v67, %v544
    %v546 = vrcp.pop %v485
    %v547 = vmul.f32 %v68, %v546
    %v548 = vrcp.pop %v486
    %v549 = vmul.f32 %v69, %v548
    %v550 = vrcp.pop %v487
    %v551 = vmul.f32 %v70, %v550
    %v553 = vsel %vm77, %v101, 0
    %v556 = vsel %vm77, %v489, 0
    %v559 = vsel %vm77, %v491, 0
    %v562 = vsel %vm77, %v493, 0
    %v565 = vsel %vm77, %v495, 0
    %v568 = vsel %vm77, %v497, 0
    %v571 = vsel %vm77, %v499, 0
    %v574 = vsel %vm77, %v501, 0
    %v577 = vsel %vm77, %v503, 0
    %v580 = vsel %vm77, %v505, 0
    %v583 = vsel %vm77, %v507, 0
    %v586 = vsel %vm77, %v509, 0
    %v589 = vsel %vm77, %v511, 0
    %v592 = vsel %vm77, %v513, 0
    %v595 = vsel %vm77, %v515, 0
    %v598 = vsel %vm77, %v517, 0
    %v601 = vsel %vm77, %v519, 0
    %603 = vmatprep.subr.mxu0 0.0
    %604 = vmatpush1.xpose.msra.mxu0 %v556
    %605 = vmatprep.subr.mxu0 0.0
    %606 = vmatpush1.xpose.msra.mxu0 %v559
    %607 = vmatprep.subr.mxu0 0.0
    %608 = vmatpush1.xpose.msra.mxu0 %v562
    %609 = vmatprep.subr.mxu0 0.0
    %610 = vmatpush1.xpose.msra.mxu0 %v565
    %611 = vmatprep.subr.mxu0 0.0
    %612 = vmatpush1.xpose.msra.mxu0 %v568
    %613 = vmatprep.subr.mxu0 0.0
    %614 = vmatpush1.xpose.msra.mxu0 %v571
    %615 = vmatprep.subr.mxu0 0.0
    %616 = vmatpush1.xpose.msra.mxu0 %v574
    %617 = vmatprep.subr.mxu0 0.0
    %618 = vmatpush1.xpose.msra.mxu0 %v577
    %619 = vmatprep.subr.mxu0 0.0
    %620 = vmatpush1.xpose.msra.mxu0 %v580
    %621 = vmatprep.subr.mxu0 0.0
    %622 = vmatpush1.xpose.msra.mxu0 %v583
    %623 = vmatprep.subr.mxu0 0.0
    %624 = vmatpush1.xpose.msra.mxu0 %v586
    %625 = vmatprep.subr.mxu0 0.0
    %626 = vmatpush1.xpose.msra.mxu0 %v589
    %627 = vmatprep.subr.mxu0 0.0
    %628 = vmatpush1.xpose.msra.mxu0 %v592
    %629 = vmatprep.subr.mxu0 0.0
    %630 = vmatpush1.xpose.msra.mxu0 %v595
    %631 = vmatprep.subr.mxu0 0.0
    %632 = vmatpush1.xpose.msra.mxu0 %v598
    %633 = vmatprep.subr.mxu0 0.0
    %634 = vmatpush1.xpose.msra.mxu0 %v601
    %635 = vmatprep.subr.mxu0 0.0
    %636 = vmatpush1.xpose.msra.mxu0 0.0
    %637 = vmatprep.subr.mxu0 0.0
    %638 = vmatpush1.xpose.msra.mxu0 0.0
    %639 = vmatprep.subr.mxu0 0.0
    %640 = vmatpush1.xpose.msra.mxu0 0.0
    %641 = vmatprep.subr.mxu0 0.0
    %642 = vmatpush1.xpose.msra.mxu0 0.0
    %643 = vmatprep.subr.mxu0 0.0
    %644 = vmatpush1.xpose.msra.mxu0 0.0
    %645 = vmatprep.subr.mxu0 0.0
    %646 = vmatpush1.xpose.msra.mxu0 0.0
    %647 = vmatprep.subr.mxu0 0.0
    %648 = vmatpush1.xpose.msra.mxu0 0.0
    %649 = vmatprep.subr.mxu0 0.0
    %650 = vmatpush1.xpose.msra.mxu0 0.0
    %651 = vmatprep.subr.mxu0 0.0
    %652 = vmatpush1.xpose.msra.mxu0 0.0
    %653 = vmatprep.subr.mxu0 0.0
    %654 = vmatpush1.xpose.msra.mxu0 0.0
    %655 = vmatprep.subr.mxu0 0.0
    %656 = vmatpush1.xpose.msra.mxu0 0.0
    %657 = vmatprep.subr.mxu0 0.0
    %658 = vmatpush1.xpose.msra.mxu0 0.0
    %659 = vmatprep.subr.mxu0 0.0
    %660 = vmatpush1.xpose.msra.mxu0 0.0
    %661 = vmatprep.subr.mxu0 0.0
    %662 = vmatpush1.xpose.msra.mxu0 0.0
    %663 = vmatprep.subr.mxu0 0.0
    %664 = vmatpush1.xpose.msra.mxu0 0.0
    %665 = vmatprep.subr.mxu0 0.0
    %666 = vmatpush1.xpose.msra.mxu0 0.0
    %667 = vmatprep.mubr.f32.mxu0 0.0
    %668 = vmatmul.mubr.f32.gmra.mrb[0].mxu0 %v553
    %v669 = vpop.f32.mrb[0].mxu0
    %v670 = vadd.f32 0.0, %v669
    %v671 = vpop.f32.mrb[0].mxu0
    %672 = vdwg.mxu0
    %v674 = vsel %vm77, %v103, 0
    %v677 = vsel %vm77, %v521, 0
    %v680 = vsel %vm77, %v523, 0
    %v683 = vsel %vm77, %v525, 0
    %v686 = vsel %vm77, %v527, 0
    %v689 = vsel %vm77, %v529, 0
    %v692 = vsel %vm77, %v531, 0
    %v695 = vsel %vm77, %v533, 0
    %v698 = vsel %vm77, %v535, 0
    %v701 = vsel %vm77, %v537, 0
    %v704 = vsel %vm77, %v539, 0
    %v707 = vsel %vm77, %v541, 0
    %v710 = vsel %vm77, %v543, 0
    %v713 = vsel %vm77, %v545, 0
    %v716 = vsel %vm77, %v547, 0
    %v719 = vsel %vm77, %v549, 0
    %v722 = vsel %vm77, %v551, 0
    %724 = vmatprep.subr.mxu0 0.0
    %725 = vmatpush1.xpose.msra.mxu0 %v677
    %726 = vmatprep.subr.mxu0 0.0
    %727 = vmatpush1.xpose.msra.mxu0 %v680
    %728 = vmatprep.subr.mxu0 0.0
    %729 = vmatpush1.xpose.msra.mxu0 %v683
    %730 = vmatprep.subr.mxu0 0.0
    %731 = vmatpush1.xpose.msra.mxu0 %v686
    %732 = vmatprep.subr.mxu0 0.0
    %733 = vmatpush1.xpose.msra.mxu0 %v689
    %734 = vmatprep.subr.mxu0 0.0
    %735 = vmatpush1.xpose.msra.mxu0 %v692
    %736 = vmatprep.subr.mxu0 0.0
    %737 = vmatpush1.xpose.msra.mxu0 %v695
    %738 = vmatprep.subr.mxu0 0.0
    %739 = vmatpush1.xpose.msra.mxu0 %v698
    %740 = vmatprep.subr.mxu0 0.0
    %741 = vmatpush1.xpose.msra.mxu0 %v701
    %742 = vmatprep.subr.mxu0 0.0
    %743 = vmatpush1.xpose.msra.mxu0 %v704
    %744 = vmatprep.subr.mxu0 0.0
    %745 = vmatpush1.xpose.msra.mxu0 %v707
    %746 = vmatprep.subr.mxu0 0.0
    %747 = vmatpush1.xpose.msra.mxu0 %v710
    %748 = vmatprep.subr.mxu0 0.0
    %749 = vmatpush1.xpose.msra.mxu0 %v713
    %750 = vmatprep.subr.mxu0 0.0
    %751 = vmatpush1.xpose.msra.mxu0 %v716
    %752 = vmatprep.subr.mxu0 0.0
    %753 = vmatpush1.xpose.msra.mxu0 %v719
    %754 = vmatprep.subr.mxu0 0.0
    %755 = vmatpush1.xpose.msra.mxu0 %v722
    %756 = vmatprep.subr.mxu0 0.0
    %757 = vmatpush1.xpose.msra.mxu0 0.0
    %758 = vmatprep.subr.mxu0 0.0
    %759 = vmatpush1.xpose.msra.mxu0 0.0
    %760 = vmatprep.subr.mxu0 0.0
    %761 = vmatpush1.xpose.msra.mxu0 0.0
    %762 = vmatprep.subr.mxu0 0.0
    %763 = vmatpush1.xpose.msra.mxu0 0.0
    %764 = vmatprep.subr.mxu0 0.0
    %765 = vmatpush1.xpose.msra.mxu0 0.0
    %766 = vmatprep.subr.mxu0 0.0
    %767 = vmatpush1.xpose.msra.mxu0 0.0
    %768 = vmatprep.subr.mxu0 0.0
    %769 = vmatpush1.xpose.msra.mxu0 0.0
    %770 = vmatprep.subr.mxu0 0.0
    %771 = vmatpush1.xpose.msra.mxu0 0.0
    %772 = vmatprep.subr.mxu0 0.0
    %773 = vmatpush1.xpose.msra.mxu0 0.0
    %774 = vmatprep.subr.mxu0 0.0
    %775 = vmatpush1.xpose.msra.mxu0 0.0
    %776 = vmatprep.subr.mxu0 0.0
    %777 = vmatpush1.xpose.msra.mxu0 0.0
    %778 = vmatprep.subr.mxu0 0.0
    %779 = vmatpush1.xpose.msra.mxu0 0.0
    %780 = vmatprep.subr.mxu0 0.0
    %781 = vmatpush1.xpose.msra.mxu0 0.0
    %782 = vmatprep.subr.mxu0 0.0
    %783 = vmatpush1.xpose.msra.mxu0 0.0
    %784 = vmatprep.subr.mxu0 0.0
    %785 = vmatpush1.xpose.msra.mxu0 0.0
    %786 = vmatprep.subr.mxu0 0.0
    %787 = vmatpush1.xpose.msra.mxu0 0.0
    %788 = vmatprep.mubr.f32.mxu0 0.0
    %789 = vmatmul.mubr.f32.gmra.mrb[0].mxu0 %v674
    %v790 = vpop.f32.mrb[0].mxu0
    %v791 = vadd.f32 0.0, %v790
    %v792 = vpop.f32.mrb[0].mxu0
    %793 = vdwg.mxu0
    %s794 = sld [smem:[#allocation2]]
    %v795 = vstv %s794
    %v796 = vadd.f32 %v795, 0.0
    %v797 = vsub.f32 %v670, 1.0
    %v798 = vsub.f32 %v791, 1.0
    %v799 = vmul.f32 %v797, %v797
    %v800 = vmul.f32 %v798, %v798
    %v801 = vmul.f32 %v799, -500000.0
    %v802 = vmul.f32 %v800, -500000.0
    %v803 = vmul.f32 %v801, 1.442695
    %v804 = vpow.pop %v803
    %v805 = vmul.f32 %v802, 1.442695
    %v806 = vpow.pop %v805
    %v809 = vlaneseq
    %v810 = vshrl.u32 %v809, 7
    %v811 = vsub.s32 0, %v810
    %v812 = vrot.slane %v73, %v811
    %v813 = vlaneseq
    %v814 = vshrl.u32 %v813, 7
    %v815 = vsub.s32 0, %v814
    %v816 = vrot.slane %v74, %v815
    %v819 = vmul.f32 %v804, %v812
    %v820 = vmul.f32 %v806, %v816
    %821 = vadd.xlane.f32.xlu0 %v819
    %v822 = vpop.xlane.xlu0 %821
    %823 = vadd.xlane.f32.xlu0 %v820
    %v824 = vpop.xlane.xlu0 %823
    %v825 = vmax.f32 %v822, 1e-10
    %v826 = vmax.f32 %v824, 1e-10
    %v827 = vlog2.pop %v825
    %v828 = vmul.f32 %v827, 0.6931472
    %v829 = vlog2.pop %v826
    %v830 = vmul.f32 %v829, 0.6931472
    %v831 = vmul.f32 %v828, %v71
    %v832 = vmul.f32 %v830, %v72
    %vm833 = vcmask 7168
    %v834 = vsel %vm833, %v831, 0.0
    %v835 = vrot.slane %v834, 4
    %v836 = vadd.f32 %v834, %v835
    %v837 = vrot.slane %v836, 2
    %v838 = vadd.f32 %v836, %v837
    %v839 = vrot.slane %v838, 1
    %v840 = vadd.f32 %v838, %v839
    %v841 = vsel %vm833, %v832, 0.0
    %v842 = vrot.slane %v841, 4
    %v843 = vadd.f32 %v841, %v842
    %v844 = vrot.slane %v843, 2
    %v845 = vadd.f32 %v843, %v844
    %v846 = vrot.slane %v845, 1
    %v847 = vadd.f32 %v845, %v846
    %s848 = sld [smem:[#allocation3]]
    %v849 = vstv %s848
    %v850 = vmul.f32 %v849, %v840
    %v851 = vmul.f32 %v849, %v847
    %v852 = vadd.f32 %v796, %v850
    %v853 = vadd.f32 %v796, %v851
    %v854 = vsub.f32 %v670, 0.9
    %v855 = vsub.f32 %v791, 0.9
    %v856 = vmul.f32 %v854, %v854
    %v857 = vmul.f32 %v855, %v855
    %v858 = vmul.f32 %v856, -50.0
    %v859 = vmul.f32 %v857, -50.0
    %v860 = vmul.f32 %v858, 1.442695
    %v861 = vpow.pop %v860
    %v862 = vmul.f32 %v859, 1.442695
    %v863 = vpow.pop %v862
    %v864 = vmul.f32 %v861, %v812
    %v865 = vmul.f32 %v863, %v816
    %866 = vadd.xlane.f32.xlu0 %v864
    %v867 = vpop.xlane.xlu0 %866
    %868 = vadd.xlane.f32.xlu0 %v865
    %v869 = vpop.xlane.xlu0 %868
    %v870 = vmax.f32 %v867, 1e-10
    %v871 = vmax.f32 %v869, 1e-10
    %v872 = vlog2.pop %v870
    %v873 = vmul.f32 %v872, 0.6931472
    %v874 = vlog2.pop %v871
    %v875 = vmul.f32 %v874, 0.6931472
    %v876 = vmul.f32 %v873, %v71
    %v877 = vmul.f32 %v875, %v72
    %v878 = vsel %vm833, %v876, 0.0
    %v879 = vrot.slane %v878, 4
    %v880 = vadd.f32 %v878, %v879
    %v881 = vrot.slane %v880, 2
    %v882 = vadd.f32 %v880, %v881
    %v883 = vrot.slane %v882, 1
    %v884 = vadd.f32 %v882, %v883
    %v885 = vsel %vm833, %v877, 0.0
    %v886 = vrot.slane %v885, 4
    %v887 = vadd.f32 %v885, %v886
    %v888 = vrot.slane %v887, 2
    %v889 = vadd.f32 %v887, %v888
    %v890 = vrot.slane %v889, 1
    %v891 = vadd.f32 %v889, %v890
    %s892 = sld [smem:[#allocation3 + $0x1]]
    %v893 = vstv %s892
    %v894 = vmul.f32 %v893, %v884
    %v895 = vmul.f32 %v893, %v891
    %v896 = vadd.f32 %v852, %v894
    %v897 = vadd.f32 %v853, %v895
    %v898 = vsub.f32 %v670, 0.7
    %v899 = vsub.f32 %v791, 0.7
    %v900 = vmul.f32 %v898, %v898
    %v901 = vmul.f32 %v899, %v899
    %v902 = vmul.f32 %v900, -50.0
    %v903 = vmul.f32 %v901, -50.0
    %v904 = vmul.f32 %v902, 1.442695
    %v905 = vpow.pop %v904
    %v906 = vmul.f32 %v903, 1.442695
    %v907 = vpow.pop %v906
    %v908 = vmul.f32 %v905, %v812
    %v909 = vmul.f32 %v907, %v816
    %910 = vadd.xlane.f32.xlu0 %v908
    %v911 = vpop.xlane.xlu0 %910
    %912 = vadd.xlane.f32.xlu0 %v909
    %v913 = vpop.xlane.xlu0 %912
    %v914 = vmax.f32 %v911, 1e-10
    %v915 = vmax.f32 %v913, 1e-10
    %v916 = vlog2.pop %v914
    %v917 = vmul.f32 %v916, 0.6931472
    %v918 = vlog2.pop %v915
    %v919 = vmul.f32 %v918, 0.6931472
    %v920 = vmul.f32 %v917, %v71
    %v921 = vmul.f32 %v919, %v72
    %v922 = vsel %vm833, %v920, 0.0
    %v923 = vrot.slane %v922, 4
    %v924 = vadd.f32 %v922, %v923
    %v925 = vrot.slane %v924, 2
    %v926 = vadd.f32 %v924, %v925
    %v927 = vrot.slane %v926, 1
    %v928 = vadd.f32 %v926, %v927
    %v929 = vsel %vm833, %v921, 0.0
    %v930 = vrot.slane %v929, 4
    %v931 = vadd.f32 %v929, %v930
    %v932 = vrot.slane %v931, 2
    %v933 = vadd.f32 %v931, %v932
    %v934 = vrot.slane %v933, 1
    %v935 = vadd.f32 %v933, %v934
    %s936 = sld [smem:[#allocation3 + $0x2]]
    %v937 = vstv %s936
    %v938 = vmul.f32 %v937, %v928
    %v939 = vmul.f32 %v937, %v935
    %v940 = vadd.f32 %v896, %v938
    %v941 = vadd.f32 %v897, %v939
    %v942 = vsub.f32 %v670, 0.5
    %v943 = vsub.f32 %v791, 0.5
    %v944 = vmul.f32 %v942, %v942
    %v945 = vmul.f32 %v943, %v943
    %v946 = vmul.f32 %v944, -50.0
    %v947 = vmul.f32 %v945, -50.0
    %v948 = vmul.f32 %v946, 1.442695
    %v949 = vpow.pop %v948
    %v950 = vmul.f32 %v947, 1.442695
    %v951 = vpow.pop %v950
    %v952 = vmul.f32 %v949, %v812
    %v953 = vmul.f32 %v951, %v816
    %954 = vadd.xlane.f32.xlu0 %v952
    %v955 = vpop.xlane.xlu0 %954
    %956 = vadd.xlane.f32.xlu0 %v953
    %v957 = vpop.xlane.xlu0 %956
    %v958 = vmax.f32 %v955, 1e-10
    %v959 = vmax.f32 %v957, 1e-10
    %v960 = vlog2.pop %v958
    %v961 = vmul.f32 %v960, 0.6931472
    %v962 = vlog2.pop %v959
    %v963 = vmul.f32 %v962, 0.6931472
    %v964 = vmul.f32 %v961, %v71
    %v965 = vmul.f32 %v963, %v72
    %v966 = vsel %vm833, %v964, 0.0
    %v967 = vrot.slane %v966, 4
    %v968 = vadd.f32 %v966, %v967
    %v969 = vrot.slane %v968, 2
    %v970 = vadd.f32 %v968, %v969
    %v971 = vrot.slane %v970, 1
    %v972 = vadd.f32 %v970, %v971
    %v973 = vsel %vm833, %v965, 0.0
    %v974 = vrot.slane %v973, 4
    %v975 = vadd.f32 %v973, %v974
    %v976 = vrot.slane %v975, 2
    %v977 = vadd.f32 %v975, %v976
    %v978 = vrot.slane %v977, 1
    %v979 = vadd.f32 %v977, %v978
    %s980 = sld [smem:[#allocation3 + $0x3]]
    %v981 = vstv %s980
    %v982 = vmul.f32 %v981, %v972
    %v983 = vmul.f32 %v981, %v979
    %v984 = vadd.f32 %v940, %v982
    %v985 = vadd.f32 %v941, %v983
    %v986 = vsub.f32 %v670, 0.3
    %v987 = vsub.f32 %v791, 0.3
    %v988 = vmul.f32 %v986, %v986
    %v989 = vmul.f32 %v987, %v987
    %v990 = vmul.f32 %v988, -50.0
    %v991 = vmul.f32 %v989, -50.0
    %v992 = vmul.f32 %v990, 1.442695
    %v993 = vpow.pop %v992
    %v994 = vmul.f32 %v991, 1.442695
    %v995 = vpow.pop %v994
    %v996 = vmul.f32 %v993, %v812
    %v997 = vmul.f32 %v995, %v816
    %998 = vadd.xlane.f32.xlu0 %v996
    %v999 = vpop.xlane.xlu0 %998
    %1000 = vadd.xlane.f32.xlu0 %v997
    %v1001 = vpop.xlane.xlu0 %1000
    %v1002 = vmax.f32 %v999, 1e-10
    %v1003 = vmax.f32 %v1001, 1e-10
    %v1004 = vlog2.pop %v1002
    %v1005 = vmul.f32 %v1004, 0.6931472
    %v1006 = vlog2.pop %v1003
    %v1007 = vmul.f32 %v1006, 0.6931472
    %v1008 = vmul.f32 %v1005, %v71
    %v1009 = vmul.f32 %v1007, %v72
    %v1010 = vsel %vm833, %v1008, 0.0
    %v1011 = vrot.slane %v1010, 4
    %v1012 = vadd.f32 %v1010, %v1011
    %v1013 = vrot.slane %v1012, 2
    %v1014 = vadd.f32 %v1012, %v1013
    %v1015 = vrot.slane %v1014, 1
    %v1016 = vadd.f32 %v1014, %v1015
    %v1017 = vsel %vm833, %v1009, 0.0
    %v1018 = vrot.slane %v1017, 4
    %v1019 = vadd.f32 %v1017, %v1018
    %v1020 = vrot.slane %v1019, 2
    %v1021 = vadd.f32 %v1019, %v1020
    %v1022 = vrot.slane %v1021, 1
    %v1023 = vadd.f32 %v1021, %v1022
    %s1024 = sld [smem:[#allocation3 + $0x4]]
    %v1025 = vstv %s1024
    %v1026 = vmul.f32 %v1025, %v1016
    %v1027 = vmul.f32 %v1025, %v1023
    %v1028 = vadd.f32 %v984, %v1026
    %v1029 = vadd.f32 %v985, %v1027
    %v1030 = vsub.f32 %v670, 0.1
    %v1031 = vsub.f32 %v791, 0.1
    %v1032 = vmul.f32 %v1030, %v1030
    %v1033 = vmul.f32 %v1031, %v1031
    %v1034 = vmul.f32 %v1032, -50.0
    %v1035 = vmul.f32 %v1033, -50.0
    %v1036 = vmul.f32 %v1034, 1.442695
    %v1037 = vpow.pop %v1036
    %v1038 = vmul.f32 %v1035, 1.442695
    %v1039 = vpow.pop %v1038
    %v1040 = vmul.f32 %v1037, %v812
    %v1041 = vmul.f32 %v1039, %v816
    %1042 = vadd.xlane.f32.xlu0 %v1040
    %v1043 = vpop.xlane.xlu0 %1042
    %1044 = vadd.xlane.f32.xlu0 %v1041
    %v1045 = vpop.xlane.xlu0 %1044
    %v1046 = vmax.f32 %v1043, 1e-10
    %v1047 = vmax.f32 %v1045, 1e-10
    %v1048 = vlog2.pop %v1046
    %v1049 = vmul.f32 %v1048, 0.6931472
    %v1050 = vlog2.pop %v1047
    %v1051 = vmul.f32 %v1050, 0.6931472
    %v1052 = vmul.f32 %v1049, %v71
    %v1053 = vmul.f32 %v1051, %v72
    %v1054 = vsel %vm833, %v1052, 0.0
    %v1055 = vrot.slane %v1054, 4
    %v1056 = vadd.f32 %v1054, %v1055
    %v1057 = vrot.slane %v1056, 2
    %v1058 = vadd.f32 %v1056, %v1057
    %v1059 = vrot.slane %v1058, 1
    %v1060 = vadd.f32 %v1058, %v1059
    %v1061 = vsel %vm833, %v1053, 0.0
    %v1062 = vrot.slane %v1061, 4
    %v1063 = vadd.f32 %v1061, %v1062
    %v1064 = vrot.slane %v1063, 2
    %v1065 = vadd.f32 %v1063, %v1064
    %v1066 = vrot.slane %v1065, 1
    %v1067 = vadd.f32 %v1065, %v1066
    %s1068 = sld [smem:[#allocation3 + $0x5]]
    %v1069 = vstv %s1068
    %v1070 = vmul.f32 %v1069, %v1060
    %v1071 = vmul.f32 %v1069, %v1067
    %v1072 = vadd.f32 %v1028, %v1070
    %v1073 = vadd.f32 %v1029, %v1071
    %v1074 = vsub.f32 %v670, -0.1
    %v1075 = vsub.f32 %v791, -0.1
    %v1076 = vmul.f32 %v1074, %v1074
    %v1077 = vmul.f32 %v1075, %v1075
    %v1078 = vmul.f32 %v1076, -50.0
    %v1079 = vmul.f32 %v1077, -50.0
    %v1080 = vmul.f32 %v1078, 1.442695
    %v1081 = vpow.pop %v1080
    %v1082 = vmul.f32 %v1079, 1.442695
    %v1083 = vpow.pop %v1082
    %v1084 = vmul.f32 %v1081, %v812
    %v1085 = vmul.f32 %v1083, %v816
    %1086 = vadd.xlane.f32.xlu0 %v1084
    %v1087 = vpop.xlane.xlu0 %1086
    %1088 = vadd.xlane.f32.xlu0 %v1085
    %v1089 = vpop.xlane.xlu0 %1088
    %v1090 = vmax.f32 %v1087, 1e-10
    %v1091 = vmax.f32 %v1089, 1e-10
    %v1092 = vlog2.pop %v1090
    %v1093 = vmul.f32 %v1092, 0.6931472
    %v1094 = vlog2.pop %v1091
    %v1095 = vmul.f32 %v1094, 0.6931472
    %v1096 = vmul.f32 %v1093, %v71
    %v1097 = vmul.f32 %v1095, %v72
    %v1098 = vsel %vm833, %v1096, 0.0
    %v1099 = vrot.slane %v1098, 4
    %v1100 = vadd.f32 %v1098, %v1099
    %v1101 = vrot.slane %v1100, 2
    %v1102 = vadd.f32 %v1100, %v1101
    %v1103 = vrot.slane %v1102, 1
    %v1104 = vadd.f32 %v1102, %v1103
    %v1105 = vsel %vm833, %v1097, 0.0
    %v1106 = vrot.slane %v1105, 4
    %v1107 = vadd.f32 %v1105, %v1106
    %v1108 = vrot.slane %v1107, 2
    %v1109 = vadd.f32 %v1107, %v1108
    %v1110 = vrot.slane %v1109, 1
    %v1111 = vadd.f32 %v1109, %v1110
    %s1112 = sld [smem:[#allocation3 + $0x6]]
    %v1113 = vstv %s1112
    %v1114 = vmul.f32 %v1113, %v1104
    %v1115 = vmul.f32 %v1113, %v1111
    %v1116 = vadd.f32 %v1072, %v1114
    %v1117 = vadd.f32 %v1073, %v1115
    %v1118 = vsub.f32 %v670, -0.3
    %v1119 = vsub.f32 %v791, -0.3
    %v1120 = vmul.f32 %v1118, %v1118
    %v1121 = vmul.f32 %v1119, %v1119
    %v1122 = vmul.f32 %v1120, -50.0
    %v1123 = vmul.f32 %v1121, -50.0
    %v1124 = vmul.f32 %v1122, 1.442695
    %v1125 = vpow.pop %v1124
    %v1126 = vmul.f32 %v1123, 1.442695
    %v1127 = vpow.pop %v1126
    %v1128 = vmul.f32 %v1125, %v812
    %v1129 = vmul.f32 %v1127, %v816
    %1130 = vadd.xlane.f32.xlu0 %v1128
    %v1131 = vpop.xlane.xlu0 %1130
    %1132 = vadd.xlane.f32.xlu0 %v1129
    %v1133 = vpop.xlane.xlu0 %1132
    %v1134 = vmax.f32 %v1131, 1e-10
    %v1135 = vmax.f32 %v1133, 1e-10
    %v1136 = vlog2.pop %v1134
    %v1137 = vmul.f32 %v1136, 0.6931472
    %v1138 = vlog2.pop %v1135
    %v1139 = vmul.f32 %v1138, 0.6931472
    %v1140 = vmul.f32 %v1137, %v71
    %v1141 = vmul.f32 %v1139, %v72
    %v1142 = vsel %vm833, %v1140, 0.0
    %v1143 = vrot.slane %v1142, 4
    %v1144 = vadd.f32 %v1142, %v1143
    %v1145 = vrot.slane %v1144, 2
    %v1146 = vadd.f32 %v1144, %v1145
    %v1147 = vrot.slane %v1146, 1
    %v1148 = vadd.f32 %v1146, %v1147
    %v1149 = vsel %vm833, %v1141, 0.0
    %v1150 = vrot.slane %v1149, 4
    %v1151 = vadd.f32 %v1149, %v1150
    %v1152 = vrot.slane %v1151, 2
    %v1153 = vadd.f32 %v1151, %v1152
    %v1154 = vrot.slane %v1153, 1
    %v1155 = vadd.f32 %v1153, %v1154
    %s1156 = sld [smem:[#allocation3 + $0x7]]
    %v1157 = vstv %s1156
    %v1158 = vmul.f32 %v1157, %v1148
    %v1159 = vmul.f32 %v1157, %v1155
    %v1160 = vadd.f32 %v1116, %v1158
    %v1161 = vadd.f32 %v1117, %v1159
    %v1162 = vsub.f32 %v670, -0.5
    %v1163 = vsub.f32 %v791, -0.5
    %v1164 = vmul.f32 %v1162, %v1162
    %v1165 = vmul.f32 %v1163, %v1163
    %v1166 = vmul.f32 %v1164, -50.0
    %v1167 = vmul.f32 %v1165, -50.0
    %v1168 = vmul.f32 %v1166, 1.442695
    %v1169 = vpow.pop %v1168
    %v1170 = vmul.f32 %v1167, 1.442695
    %v1171 = vpow.pop %v1170
    %v1172 = vmul.f32 %v1169, %v812
    %v1173 = vmul.f32 %v1171, %v816
    %1174 = vadd.xlane.f32.xlu0 %v1172
    %v1175 = vpop.xlane.xlu0 %1174
    %1176 = vadd.xlane.f32.xlu0 %v1173
    %v1177 = vpop.xlane.xlu0 %1176
    %v1178 = vmax.f32 %v1175, 1e-10
    %v1179 = vmax.f32 %v1177, 1e-10
    %v1180 = vlog2.pop %v1178
    %v1181 = vmul.f32 %v1180, 0.6931472
    %v1182 = vlog2.pop %v1179
    %v1183 = vmul.f32 %v1182, 0.6931472
    %v1184 = vmul.f32 %v1181, %v71
    %v1185 = vmul.f32 %v1183, %v72
    %v1186 = vsel %vm833, %v1184, 0.0
    %v1187 = vrot.slane %v1186, 4
    %v1188 = vadd.f32 %v1186, %v1187
    %v1189 = vrot.slane %v1188, 2
    %v1190 = vadd.f32 %v1188, %v1189
    %v1191 = vrot.slane %v1190, 1
    %v1192 = vadd.f32 %v1190, %v1191
    %v1193 = vsel %vm833, %v1185, 0.0
    %v1194 = vrot.slane %v1193, 4
    %v1195 = vadd.f32 %v1193, %v1194
    %v1196 = vrot.slane %v1195, 2
    %v1197 = vadd.f32 %v1195, %v1196
    %v1198 = vrot.slane %v1197, 1
    %v1199 = vadd.f32 %v1197, %v1198
    %s1200 = sld [smem:[#allocation3 + $0x8]]
    %v1201 = vstv %s1200
    %v1202 = vmul.f32 %v1201, %v1192
    %v1203 = vmul.f32 %v1201, %v1199
    %v1204 = vadd.f32 %v1160, %v1202
    %v1205 = vadd.f32 %v1161, %v1203
    %v1206 = vsub.f32 %v670, -0.7
    %v1207 = vsub.f32 %v791, -0.7
    %v1208 = vmul.f32 %v1206, %v1206
    %v1209 = vmul.f32 %v1207, %v1207
    %v1210 = vmul.f32 %v1208, -50.0
    %v1211 = vmul.f32 %v1209, -50.0
    %v1212 = vmul.f32 %v1210, 1.442695
    %v1213 = vpow.pop %v1212
    %v1214 = vmul.f32 %v1211, 1.442695
    %v1215 = vpow.pop %v1214
    %v1216 = vmul.f32 %v1213, %v812
    %v1217 = vmul.f32 %v1215, %v816
    %1218 = vadd.xlane.f32.xlu0 %v1216
    %v1219 = vpop.xlane.xlu0 %1218
    %1220 = vadd.xlane.f32.xlu0 %v1217
    %v1221 = vpop.xlane.xlu0 %1220
    %v1222 = vmax.f32 %v1219, 1e-10
    %v1223 = vmax.f32 %v1221, 1e-10
    %v1224 = vlog2.pop %v1222
    %v1225 = vmul.f32 %v1224, 0.6931472
    %v1226 = vlog2.pop %v1223
    %v1227 = vmul.f32 %v1226, 0.6931472
    %v1228 = vmul.f32 %v1225, %v71
    %v1229 = vmul.f32 %v1227, %v72
    %v1230 = vsel %vm833, %v1228, 0.0
    %v1231 = vrot.slane %v1230, 4
    %v1232 = vadd.f32 %v1230, %v1231
    %v1233 = vrot.slane %v1232, 2
    %v1234 = vadd.f32 %v1232, %v1233
    %v1235 = vrot.slane %v1234, 1
    %v1236 = vadd.f32 %v1234, %v1235
    %v1237 = vsel %vm833, %v1229, 0.0
    %v1238 = vrot.slane %v1237, 4
    %v1239 = vadd.f32 %v1237, %v1238
    %v1240 = vrot.slane %v1239, 2
    %v1241 = vadd.f32 %v1239, %v1240
    %v1242 = vrot.slane %v1241, 1
    %v1243 = vadd.f32 %v1241, %v1242
    %s1244 = sld [smem:[#allocation3 + $0x9]]
    %v1245 = vstv %s1244
    %v1246 = vmul.f32 %v1245, %v1236
    %v1247 = vmul.f32 %v1245, %v1243
    %v1248 = vadd.f32 %v1204, %v1246
    %v1249 = vadd.f32 %v1205, %v1247
    %v1250 = vsub.f32 %v670, -0.9
    %v1251 = vsub.f32 %v791, -0.9
    %v1252 = vmul.f32 %v1250, %v1250
    %v1253 = vmul.f32 %v1251, %v1251
    %v1254 = vmul.f32 %v1252, -50.0
    %v1255 = vmul.f32 %v1253, -50.0
    %v1256 = vmul.f32 %v1254, 1.442695
    %v1257 = vpow.pop %v1256
    %v1258 = vmul.f32 %v1255, 1.442695
    %v1259 = vpow.pop %v1258
    %v1260 = vmul.f32 %v1257, %v812
    %v1261 = vmul.f32 %v1259, %v816
    %1262 = vadd.xlane.f32.xlu0 %v1260
    %v1263 = vpop.xlane.xlu0 %1262
    %1264 = vadd.xlane.f32.xlu0 %v1261
    %v1265 = vpop.xlane.xlu0 %1264
    %v1266 = vmax.f32 %v1263, 1e-10
    %v1267 = vmax.f32 %v1265, 1e-10
    %v1268 = vlog2.pop %v1266
    %v1269 = vmul.f32 %v1268, 0.6931472
    %v1270 = vlog2.pop %v1267
    %v1271 = vmul.f32 %v1270, 0.6931472
    %v1272 = vmul.f32 %v1269, %v71
    %v1273 = vmul.f32 %v1271, %v72
    %v1274 = vsel %vm833, %v1272, 0.0
    %v1275 = vrot.slane %v1274, 4
    %v1276 = vadd.f32 %v1274, %v1275
    %v1277 = vrot.slane %v1276, 2
    %v1278 = vadd.f32 %v1276, %v1277
    %v1279 = vrot.slane %v1278, 1
    %v1280 = vadd.f32 %v1278, %v1279
    %v1281 = vsel %vm833, %v1273, 0.0
    %v1282 = vrot.slane %v1281, 4
    %v1283 = vadd.f32 %v1281, %v1282
    %v1284 = vrot.slane %v1283, 2
    %v1285 = vadd.f32 %v1283, %v1284
    %v1286 = vrot.slane %v1285, 1
    %v1287 = vadd.f32 %v1285, %v1286
    %s1288 = sld [smem:[#allocation3 + $0xa]]
    %v1289 = vstv %s1288
    %v1290 = vmul.f32 %v1289, %v1280
    %v1291 = vmul.f32 %v1289, %v1287
    %v1292 = vadd.f32 %v1248, %v1290
    %v1293 = vadd.f32 %v1249, %v1291
    %v1294 = vtanh.pop %v1292
    %v1295 = vtanh.pop %v1293
    %vm1296 = vcmask 0
    %1297 = vst.msk [vmem:[%s6] sm:$0x1] %vm1296, %v1294
    %1298 = vst.msk [vmem:[%s6 + $0x1] sm:$0x1] %vm1296, %v1295
    // Predicated region
    $region30: #{tpu_custom_call.1} parent=1 // pred_check
      _
    $region31: #{tpu_custom_call.1} parent=1 // pred_check_branch
      %1300 = sbr.rel (0) target = $region33
    $region32: #{tpu_custom_call.1} parent=1 // pred_region
      _
    $region33: #{tpu_custom_call.1} parent=1 // pred_fallthru
      _
    // Predicated region
    $region34: #{tpu_custom_call.1} parent=1 // pred_check
      _
    $region35: #{tpu_custom_call.1} parent=1 // pred_check_branch
      %1302 = sbr.rel (0) target = $region37
    $region36: #{tpu_custom_call.1} parent=1 // pred_region
      _
    $region37: #{tpu_custom_call.1} parent=1 // pred_fallthru
      _
    %1303 = vsyncpa [#allocation4], 1

</llo_original>
